<compile_context>
chip_gen: v7x
topology: tpu7x:2x2x1
jax: 0.10.0
libtpu: 0.0.40
codegen_flags: <defaults>
</compile_context>

<pallas_src>
import jax
import jax.numpy as jnp
from jax.experimental import pallas as pl
from jax.experimental.pallas import tpu as pltpu


# --------------------------------------------------------------------------
# Kernel
# --------------------------------------------------------------------------

def _make_kernel(S, Bp, F, H, A, off):
    """Build the kernel closure over static shapes / packed-slab offsets."""
    f32 = jnp.float32
    bf16 = jnp.bfloat16
    A1 = A + 1
    H3 = 3 * H
    H4 = 4 * H

    def kernel(obs_ref, h0_ref, c0_ref, acts_ref, w_ref, out_ref, h_all):
        # ---- static views into the packed weight slab (free slices) --------
        wb = w_ref[off["wb"]:off["wb"] + F, 0:H]            # (F, H)
        bb = w_ref[off["bb"]:off["bb"] + 1, 0:H]            # (1, H)
        wx = w_ref[off["wx"]:off["wx"] + H, :]              # (H, 4H)
        bg = w_ref[off["bg"]:off["bg"] + 1, :]              # (1, 4H)
        # bf16 MXU operand for the serial recurrence, hoisted out of the loop.
        wh = w_ref[off["wh"]:off["wh"] + H, :].astype(bf16)  # (H, 4H)
        whead = w_ref[off["whead"]:off["whead"] + H, 0:A1]  # (H, A+1)
        bhead = w_ref[off["bhead"]:off["bhead"] + 1, 0:A1]  # (1, A+1)

        # ---- Phase 1: batched body MLP + input-side gate matmul ------------
        x = jnp.maximum(
            jnp.dot(obs_ref[...], wb, preferred_element_type=f32) + bb, 0.0)
        # Time-major (S*Bp, 4H) gate pre-activations; kept as a value (vregs).
        gx = jnp.dot(x, wx, preferred_element_type=f32) + bg

        # ---- Phase 2: serial LSTM recurrence (h @ W_h + elementwise) -------
        # h/c carried as plain values (vregs); loop fully unrolled (S static).
        h = h0_ref[...]                                      # (Bp, H) f32
        c = c0_ref[...]
        for t in range(S):
            pre = gx[t * Bp:(t + 1) * Bp, :] + jnp.dot(
                h.astype(bf16), wh, preferred_element_type=f32)   # (Bp, 4H)
            # Gate layout (i, f, o | g): one sigmoid over a (Bp, 3H) slab.
            sig = jax.nn.sigmoid(pre[:, :H3])
            g_g = jnp.tanh(pre[:, H3:])
            c = sig[:, H:2 * H] * c + sig[:, 0:H] * g_g
            h = sig[:, 2 * H:H3] * jnp.tanh(c)
            h_all[t * Bp:(t + 1) * Bp, :] = h                # off serial path

        # ---- Phase 3: batched fused [logits | value] head -------------------
        head = (jnp.dot(h_all[...], whead, preferred_element_type=f32)
                + bhead)                                     # (S*Bp, A+1)
        raw = head[:, :A]
        val = head[:, A:A1]

        m = jnp.max(raw, axis=-1, keepdims=True)
        z = raw - m
        lse = jnp.log(jnp.sum(jnp.exp(z), axis=-1, keepdims=True))
        logp_all = z - lse                                   # log_softmax
        probs = jnp.exp(logp_all)
        ent = -jnp.sum(probs * logp_all, axis=-1, keepdims=True)

        lane = jax.lax.broadcasted_iota(jnp.int32, (S * Bp, A), 1)
        onehot = (lane == acts_ref[...]).astype(f32)
        logp_a = jnp.sum(logp_all * onehot, axis=-1, keepdims=True)

        # Packed output [log_softmax | log_prob(a) | entropy | value], stored
        # via direct slice stores (no lane-axis concatenate).
        out_ref[:, 0:A] = logp_all
        out_ref[:, A:A + 1] = logp_a
        out_ref[:, A + 1:A + 2] = ent
        out_ref[:, A + 2:A + 3] = val

    return kernel


def mlp_lstm_forward(fused, obs, lstm_hxs, behaviour_acts):
    """obs: (B,S,F) f32; lstm_hxs=(hx,cx) each (B,H); behaviour_acts: (B,S,1) int."""
    B, S, F = obs.shape
    hx, cx = lstm_hxs
    H, A = fused["H"], fused["A"]
    assert F == fused["F"] and hx.shape[-1] == H

    # Pad batch to a multiple of 8 sublanes; padded rows are sliced off after.
    Bp = ((B + 7) // 8) * 8
    pad = Bp - B

    def pad_b(a):
        if pad == 0:
            return a
        return jnp.pad(a, [(0, pad)] + [(0, 0)] * (a.ndim - 1))

    obs_t = jnp.transpose(pad_b(obs), (1, 0, 2)).reshape(S * Bp, F)
    acts_t = jnp.transpose(pad_b(behaviour_acts.astype(jnp.int32)),
                           (1, 0, 2)).reshape(S * Bp, 1)
    hx_p = pad_b(hx)
    cx_p = pad_b(cx)

    kernel = _make_kernel(S, Bp, F, H, A, fused["off"])
    vmem = pl.BlockSpec(memory_space=pltpu.MemorySpace.VMEM)

    packed = pl.pallas_call(
        kernel,
        out_shape=jax.ShapeDtypeStruct((S * Bp, A + 3), jnp.float32),
        in_specs=[vmem] * 5,
        out_specs=vmem,
        scratch_shapes=[
            pltpu.VMEM((S * Bp, H), jnp.float32),   # all hidden states
        ],
        compiler_params=pltpu.CompilerParams(
            vmem_limit_bytes=32 * 1024 * 1024),
    )(obs_t, hx_p, cx_p, acts_t, fused["slab"])

    packed = packed.reshape(S, Bp, A + 3)[:, :B, :]
    packed = jnp.transpose(packed, (1, 0, 2))                # (B, S, A+3)
    logits = packed[..., :A]
    logp = packed[..., A:A + 1]
    ent = packed[..., A + 1:A + 2]
    val = packed[..., A + 2:A + 3]
    # Matches PyTorch return: (logits, log_probs, entropy, value), each (B, S, .)
    return logits, logp, ent, val


# --------------------------------------------------------------------------
# Parameter construction / fusion / pure-JAX reference
# --------------------------------------------------------------------------

def init_params(key, F, H, A):
    """Deterministic init mirroring nn.Linear / nn.LSTMCell parameter shapes."""
    ks = jax.random.split(key, 10)

    def lin(k, fan_in, shape):
        bound = 1.0 / jnp.sqrt(jnp.float32(fan_in))
        return jax.random.uniform(k, shape, jnp.float32, -bound, bound)

    wb = lin(ks[0], F, (F, H))
    bb = lin(ks[1], F, (1, H))

    w_ih = lin(ks[2], H, (4 * H, H))   # PyTorch weight_ih layout (4H, H), order i,f,g,o
    w_hh = lin(ks[3], H, (4 * H, H))
    b_ih = lin(ks[4], H, (4 * H,))
    b_hh = lin(ks[5], H, (4 * H,))

    def split_w(w):  # per-gate (H, H), transposed to (in, out)
        return [jnp.transpose(w[i * H:(i + 1) * H]) for i in range(4)]

    wxi, wxf, wxg, wxo = split_w(w_ih)
    whi, whf, whg, who = split_w(w_hh)
    bsum = b_ih + b_hh
    bi, bf, bg, bo = [bsum[i * H:(i + 1) * H][None, :] for i in range(4)]

    wv = lin(ks[6], H, (H, 1))
    bv = lin(ks[7], H, (1, 1))
    wl = lin(ks[8], H, (H, A))
    bl = lin(ks[9], H, (1, A))

    return dict(wb=wb, bb=bb,
                wxi=wxi, wxf=wxf, wxg=wxg, wxo=wxo,
                whi=whi, whf=whf, whg=whg, who=who,
                bi=bi, bf=bf, bg=bg, bo=bo,
                wv=wv, bv=bv, wl=wl, bl=bl)


def fuse_params(params):
    """One-time weight fusion: gates reordered to (i, f, o, g), input/recurrent
    gate weights concatenated to (H, 4H), heads to (H, A+1), and everything
    packed into a single lane-dense (rows, 4H) f32 slab with 8-row-aligned
    sections so the kernel needs only one weight DMA."""
    F = params["wb"].shape[0]
    H = params["whi"].shape[0]
    A = params["wl"].shape[1]
    W4 = 4 * H

    wx = jnp.concatenate(
        [params["wxi"], params["wxf"], params["wxo"], params["wxg"]], axis=1)
    wh = jnp.concatenate(
        [params["whi"], params["whf"], params["who"], params["whg"]], axis=1)
    b = jnp.concatenate(
        [params["bi"], params["bf"], params["bo"], params["bg"]], axis=1)
    whead = jnp.concatenate([params["wl"], params["wv"]], axis=1)   # (H, A+1)
    bhead = jnp.concatenate([params["bl"], params["bv"]], axis=1)   # (1, A+1)

    def a8(n):
        return ((n + 7) // 8) * 8

    r_wb = 0
    r_bb = a8(r_wb + F)
    r_wx = a8(r_bb + 1)
    r_wh = a8(r_wx + H)
    r_bg = a8(r_wh + H)
    r_whead = a8(r_bg + 1)
    r_bhead = a8(r_whead + H)
    rows = a8(r_bhead + 1)

    slab = jnp.zeros((rows, W4), jnp.float32)

    def put(s, r, m):
        return s.at[r:r + m.shape[0], 0:m.shape[1]].set(m)

    slab = put(slab, r_wb, params["wb"])
    slab = put(slab, r_bb, params["bb"])
    slab = put(slab, r_wx, wx)
    slab = put(slab, r_wh, wh)
    slab = put(slab, r_bg, b)
    slab = put(slab, r_whead, whead)
    slab = put(slab, r_bhead, bhead)

    off = dict(wb=r_wb, bb=r_bb, wx=r_wx, wh=r_wh, bg=r_bg,
               whead=r_whead, bhead=r_bhead)
    return dict(slab=slab, off=off, F=F, H=H, A=A)


def reference_forward(params, obs, lstm_hxs, behaviour_acts):
    """Pure-JAX (f32) reference of MlpLSTMBase.forward for verification."""
    B, S, F = obs.shape
    hx, cx = lstm_hxs
    x = jax.nn.relu(obs.reshape(B * S, F) @ params["wb"] + params["bb"])
    x = x.reshape(B, S, -1)
    outs = []
    for i in range(S):
        xt = x[:, i]
        ig = jax.nn.sigmoid(xt @ params["wxi"] + hx @ params["whi"] + params["bi"])
        fg = jax.nn.sigmoid(xt @ params["wxf"] + hx @ params["whf"] + params["bf"])
        gg = jnp.tanh(xt @ params["wxg"] + hx @ params["whg"] + params["bg"])
        og = jax.nn.sigmoid(xt @ params["wxo"] + hx @ params["who"] + params["bo"])
        cx = fg * cx + ig * gg
        hx = og * jnp.tanh(cx)
        outs.append(hx)
    out = jnp.stack(outs, axis=1)                               # (B, S, H)
    value = out @ params["wv"] + params["bv"]
    raw = out @ params["wl"] + params["bl"]
    logp_all = jax.nn.log_softmax(raw, axis=-1)
    probs = jnp.exp(logp_all)
    ent = -jnp.sum(probs * logp_all, axis=-1, keepdims=True)
    acts = behaviour_acts.astype(jnp.int32)                     # (B, S, 1)
    logp_a = jnp.take_along_axis(logp_all, acts, axis=-1)
    return logp_all, logp_a, ent, value


if __name__ == "__main__":
    B, S, F, H, A = 4, 8, 16, 32, 6   # batch, seq, features, hidden, n_outputs

    key = jax.random.PRNGKey(0)
    kp, ko, kh, kc, ka = jax.random.split(key, 5)

    params = init_params(kp, F, H, A)
    fused = fuse_params(params)

    obs = jax.random.normal(ko, (B, S, F), jnp.float32)
    hx0 = jax.random.normal(kh, (B, H), jnp.float32)
    cx0 = jax.random.normal(kc, (B, H), jnp.float32)
    behaviour_acts = jax.random.randint(ka, (B, S, 1), 0, A, jnp.int32)

    outs = mlp_lstm_forward(fused, obs, (hx0, cx0), behaviour_acts)
    outs = jax.block_until_ready(outs)

    refs = reference_forward(params, obs, (hx0, cx0), behaviour_acts)
    names = ["logits", "log_probs", "entropy", "value"]
    # Tolerance 1e-2: the recurrence matmul uses bf16 MXU operands (f32
    # accumulate / f32 gate math), so ~1e-3-level rounding accumulates over S
    # steps; genuine logic errors would be orders of magnitude larger.
    for name, got, want in zip(names, outs, refs):
        assert got.shape == want.shape, (name, got.shape, want.shape)
        assert jnp.allclose(got, want, rtol=1e-2, atol=1e-2), f"mismatch in {name}"

    print("KERNEL_OK")
</pallas_src>

<mosaic_0001>
module attributes {stable_mosaic.version = 11 : i64} {
  func.func @kernel(%arg0: memref<64x16xf32, #tpu.memory_space<vmem>>, %arg1: memref<8x32xf32, #tpu.memory_space<vmem>>, %arg2: memref<8x32xf32, #tpu.memory_space<vmem>>, %arg3: memref<64x1xi32, #tpu.memory_space<vmem>>, %arg4: memref<136x128xf32, #tpu.memory_space<vmem>>, %arg5: memref<64x9xf32, #tpu.memory_space<vmem>>, %arg6: memref<64x32xf32, #tpu.memory_space<vmem>>) attributes {dimension_semantics = [], scalar_prefetch = 0 : i64, scratch_operands = 1 : i64, tpu.core_type = #tpu.core_type<tc>} {
    %c0 = arith.constant 0 : index
    %c0_0 = arith.constant 0 : index
    %0 = vector.load %arg4[%c0, %c0_0] : memref<136x128xf32, #tpu.memory_space<vmem>>, vector<16x32xf32>
    %c16 = arith.constant 16 : index
    %c0_1 = arith.constant 0 : index
    %1 = vector.load %arg4[%c16, %c0_1] : memref<136x128xf32, #tpu.memory_space<vmem>>, vector<1x32xf32>
    %c24 = arith.constant 24 : index
    %c0_2 = arith.constant 0 : index
    %2 = vector.load %arg4[%c24, %c0_2] : memref<136x128xf32, #tpu.memory_space<vmem>>, vector<32x128xf32>
    %c88 = arith.constant 88 : index
    %c0_3 = arith.constant 0 : index
    %3 = vector.load %arg4[%c88, %c0_3] : memref<136x128xf32, #tpu.memory_space<vmem>>, vector<1x128xf32>
    %c56 = arith.constant 56 : index
    %c0_4 = arith.constant 0 : index
    %4 = vector.load %arg4[%c56, %c0_4] : memref<136x128xf32, #tpu.memory_space<vmem>>, vector<32x128xf32>
    %5 = arith.truncf %4 : vector<32x128xf32> to vector<32x128xbf16>
    %c96 = arith.constant 96 : index
    %c0_5 = arith.constant 0 : index
    %6 = vector.load %arg4[%c96, %c0_5] : memref<136x128xf32, #tpu.memory_space<vmem>>, vector<32x7xf32>
    %c128 = arith.constant 128 : index
    %c0_6 = arith.constant 0 : index
    %7 = vector.load %arg4[%c128, %c0_6] : memref<136x128xf32, #tpu.memory_space<vmem>>, vector<1x7xf32>
    %c0_7 = arith.constant 0 : index
    %c0_8 = arith.constant 0 : index
    %8 = vector.load %arg0[%c0_7, %c0_8] : memref<64x16xf32, #tpu.memory_space<vmem>>, vector<64x16xf32>
    %cst = arith.constant dense<0.000000e+00> : vector<64x32xf32>
    %9 = tpu.matmul %8, %0, %cst {dimension_numbers = #tpu.dot_dimension_numbers<[1], [0], [0], [1], [0, 0, 1, 1], [], []>} : vector<64x16xf32>, vector<16x32xf32>, vector<64x32xf32> -> vector<64x32xf32>
    %10 = vector.broadcast %1 : vector<1x32xf32> to vector<64x32xf32>
    %11 = arith.addf %9, %10 : vector<64x32xf32>
    %cst_9 = arith.constant 0.000000e+00 : f32
    %12 = vector.broadcast %cst_9 : f32 to vector<64x32xf32>
    %13 = arith.maximumf %11, %12 : vector<64x32xf32>
    %cst_10 = arith.constant dense<0.000000e+00> : vector<64x128xf32>
    %14 = tpu.matmul %13, %2, %cst_10 {dimension_numbers = #tpu.dot_dimension_numbers<[1], [0], [0], [1], [0, 0, 1, 1], [], []>} : vector<64x32xf32>, vector<32x128xf32>, vector<64x128xf32> -> vector<64x128xf32>
    %15 = vector.broadcast %3 : vector<1x128xf32> to vector<64x128xf32>
    %16 = arith.addf %14, %15 : vector<64x128xf32>
    %c0_11 = arith.constant 0 : index
    %c0_12 = arith.constant 0 : index
    %17 = vector.load %arg1[%c0_11, %c0_12] : memref<8x32xf32, #tpu.memory_space<vmem>>, vector<8x32xf32>
    %c0_13 = arith.constant 0 : index
    %c0_14 = arith.constant 0 : index
    %18 = vector.load %arg2[%c0_13, %c0_14] : memref<8x32xf32, #tpu.memory_space<vmem>>, vector<8x32xf32>
    %19 = vector.extract_strided_slice %16 {offsets = [0, 0], sizes = [8, 128], strides = [1, 1]} : vector<64x128xf32> to vector<8x128xf32>
    %20 = arith.truncf %17 : vector<8x32xf32> to vector<8x32xbf16>
    %cst_15 = arith.constant dense<0.000000e+00> : vector<8x128xf32>
    %21 = tpu.matmul %20, %5, %cst_15 {dimension_numbers = #tpu.dot_dimension_numbers<[1], [0], [0], [1], [0, 0, 1, 1], [], []>} : vector<8x32xbf16>, vector<32x128xbf16>, vector<8x128xf32> -> vector<8x128xf32>
    %22 = arith.addf %19, %21 : vector<8x128xf32>
    %23 = vector.extract_strided_slice %22 {offsets = [0, 0], sizes = [8, 96], strides = [1, 1]} : vector<8x128xf32> to vector<8x96xf32>
    %24 = arith.negf %23 : vector<8x96xf32>
    %25 = math.exp %24 : vector<8x96xf32>
    %cst_16 = arith.constant 1.000000e+00 : f32
    %26 = vector.broadcast %cst_16 : f32 to vector<8x96xf32>
    %27 = arith.addf %26, %25 : vector<8x96xf32>
    %28 = arith.divf %26, %27 : vector<8x96xf32>
    %29 = vector.extract_strided_slice %22 {offsets = [0, 96], sizes = [8, 32], strides = [1, 1]} : vector<8x128xf32> to vector<8x32xf32>
    %30 = math.tanh %29 : vector<8x32xf32>
    %31 = vector.extract_strided_slice %28 {offsets = [0, 32], sizes = [8, 32], strides = [1, 1]} : vector<8x96xf32> to vector<8x32xf32>
    %32 = arith.mulf %31, %18 : vector<8x32xf32>
    %33 = vector.extract_strided_slice %28 {offsets = [0, 0], sizes = [8, 32], strides = [1, 1]} : vector<8x96xf32> to vector<8x32xf32>
    %34 = arith.mulf %33, %30 : vector<8x32xf32>
    %35 = arith.addf %32, %34 : vector<8x32xf32>
    %36 = vector.extract_strided_slice %28 {offsets = [0, 64], sizes = [8, 32], strides = [1, 1]} : vector<8x96xf32> to vector<8x32xf32>
    %37 = math.tanh %35 : vector<8x32xf32>
    %38 = arith.mulf %36, %37 : vector<8x32xf32>
    %c0_17 = arith.constant 0 : index
    %c0_18 = arith.constant 0 : index
    %39 = vector.load %arg6[%c0_17, %c0_18] : memref<64x32xf32, #tpu.memory_space<vmem>>, vector<8x32xf32>
    tpu.vector_store %arg6[%c0_17, %c0_18], %38 {strides = array<i32>} : memref<64x32xf32, #tpu.memory_space<vmem>>, vector<8x32xf32>,
    %40 = vector.extract_strided_slice %16 {offsets = [8, 0], sizes = [8, 128], strides = [1, 1]} : vector<64x128xf32> to vector<8x128xf32>
    %41 = arith.truncf %38 : vector<8x32xf32> to vector<8x32xbf16>
    %cst_19 = arith.constant dense<0.000000e+00> : vector<8x128xf32>
    %42 = tpu.matmul %41, %5, %cst_19 {dimension_numbers = #tpu.dot_dimension_numbers<[1], [0], [0], [1], [0, 0, 1, 1], [], []>} : vector<8x32xbf16>, vector<32x128xbf16>, vector<8x128xf32> -> vector<8x128xf32>
    %43 = arith.addf %40, %42 : vector<8x128xf32>
    %44 = vector.extract_strided_slice %43 {offsets = [0, 0], sizes = [8, 96], strides = [1, 1]} : vector<8x128xf32> to vector<8x96xf32>
    %45 = arith.negf %44 : vector<8x96xf32>
    %46 = math.exp %45 : vector<8x96xf32>
    %cst_20 = arith.constant 1.000000e+00 : f32
    %47 = vector.broadcast %cst_20 : f32 to vector<8x96xf32>
    %48 = arith.addf %47, %46 : vector<8x96xf32>
    %49 = arith.divf %47, %48 : vector<8x96xf32>
    %50 = vector.extract_strided_slice %43 {offsets = [0, 96], sizes = [8, 32], strides = [1, 1]} : vector<8x128xf32> to vector<8x32xf32>
    %51 = math.tanh %50 : vector<8x32xf32>
    %52 = vector.extract_strided_slice %49 {offsets = [0, 32], sizes = [8, 32], strides = [1, 1]} : vector<8x96xf32> to vector<8x32xf32>
    %53 = arith.mulf %52, %35 : vector<8x32xf32>
    %54 = vector.extract_strided_slice %49 {offsets = [0, 0], sizes = [8, 32], strides = [1, 1]} : vector<8x96xf32> to vector<8x32xf32>
    %55 = arith.mulf %54, %51 : vector<8x32xf32>
    %56 = arith.addf %53, %55 : vector<8x32xf32>
    %57 = vector.extract_strided_slice %49 {offsets = [0, 64], sizes = [8, 32], strides = [1, 1]} : vector<8x96xf32> to vector<8x32xf32>
    %58 = math.tanh %56 : vector<8x32xf32>
    %59 = arith.mulf %57, %58 : vector<8x32xf32>
    %c8 = arith.constant 8 : index
    %c0_21 = arith.constant 0 : index
    %60 = vector.load %arg6[%c8, %c0_21] : memref<64x32xf32, #tpu.memory_space<vmem>>, vector<8x32xf32>
    tpu.vector_store %arg6[%c8, %c0_21], %59 {strides = array<i32>} : memref<64x32xf32, #tpu.memory_space<vmem>>, vector<8x32xf32>,
    %61 = vector.extract_strided_slice %16 {offsets = [16, 0], sizes = [8, 128], strides = [1, 1]} : vector<64x128xf32> to vector<8x128xf32>
    %62 = arith.truncf %59 : vector<8x32xf32> to vector<8x32xbf16>
    %cst_22 = arith.constant dense<0.000000e+00> : vector<8x128xf32>
    %63 = tpu.matmul %62, %5, %cst_22 {dimension_numbers = #tpu.dot_dimension_numbers<[1], [0], [0], [1], [0, 0, 1, 1], [], []>} : vector<8x32xbf16>, vector<32x128xbf16>, vector<8x128xf32> -> vector<8x128xf32>
    %64 = arith.addf %61, %63 : vector<8x128xf32>
    %65 = vector.extract_strided_slice %64 {offsets = [0, 0], sizes = [8, 96], strides = [1, 1]} : vector<8x128xf32> to vector<8x96xf32>
    %66 = arith.negf %65 : vector<8x96xf32>
    %67 = math.exp %66 : vector<8x96xf32>
    %cst_23 = arith.constant 1.000000e+00 : f32
    %68 = vector.broadcast %cst_23 : f32 to vector<8x96xf32>
    %69 = arith.addf %68, %67 : vector<8x96xf32>
    %70 = arith.divf %68, %69 : vector<8x96xf32>
    %71 = vector.extract_strided_slice %64 {offsets = [0, 96], sizes = [8, 32], strides = [1, 1]} : vector<8x128xf32> to vector<8x32xf32>
    %72 = math.tanh %71 : vector<8x32xf32>
    %73 = vector.extract_strided_slice %70 {offsets = [0, 32], sizes = [8, 32], strides = [1, 1]} : vector<8x96xf32> to vector<8x32xf32>
    %74 = arith.mulf %73, %56 : vector<8x32xf32>
    %75 = vector.extract_strided_slice %70 {offsets = [0, 0], sizes = [8, 32], strides = [1, 1]} : vector<8x96xf32> to vector<8x32xf32>
    %76 = arith.mulf %75, %72 : vector<8x32xf32>
    %77 = arith.addf %74, %76 : vector<8x32xf32>
    %78 = vector.extract_strided_slice %70 {offsets = [0, 64], sizes = [8, 32], strides = [1, 1]} : vector<8x96xf32> to vector<8x32xf32>
    %79 = math.tanh %77 : vector<8x32xf32>
    %80 = arith.mulf %78, %79 : vector<8x32xf32>
    %c16_24 = arith.constant 16 : index
    %c0_25 = arith.constant 0 : index
    %81 = vector.load %arg6[%c16_24, %c0_25] : memref<64x32xf32, #tpu.memory_space<vmem>>, vector<8x32xf32>
    tpu.vector_store %arg6[%c16_24, %c0_25], %80 {strides = array<i32>} : memref<64x32xf32, #tpu.memory_space<vmem>>, vector<8x32xf32>,
    %82 = vector.extract_strided_slice %16 {offsets = [24, 0], sizes = [8, 128], strides = [1, 1]} : vector<64x128xf32> to vector<8x128xf32>
    %83 = arith.truncf %80 : vector<8x32xf32> to vector<8x32xbf16>
    %cst_26 = arith.constant dense<0.000000e+00> : vector<8x128xf32>
    %84 = tpu.matmul %83, %5, %cst_26 {dimension_numbers = #tpu.dot_dimension_numbers<[1], [0], [0], [1], [0, 0, 1, 1], [], []>} : vector<8x32xbf16>, vector<32x128xbf16>, vector<8x128xf32> -> vector<8x128xf32>
    %85 = arith.addf %82, %84 : vector<8x128xf32>
    %86 = vector.extract_strided_slice %85 {offsets = [0, 0], sizes = [8, 96], strides = [1, 1]} : vector<8x128xf32> to vector<8x96xf32>
    %87 = arith.negf %86 : vector<8x96xf32>
    %88 = math.exp %87 : vector<8x96xf32>
    %cst_27 = arith.constant 1.000000e+00 : f32
    %89 = vector.broadcast %cst_27 : f32 to vector<8x96xf32>
    %90 = arith.addf %89, %88 : vector<8x96xf32>
    %91 = arith.divf %89, %90 : vector<8x96xf32>
    %92 = vector.extract_strided_slice %85 {offsets = [0, 96], sizes = [8, 32], strides = [1, 1]} : vector<8x128xf32> to vector<8x32xf32>
    %93 = math.tanh %92 : vector<8x32xf32>
    %94 = vector.extract_strided_slice %91 {offsets = [0, 32], sizes = [8, 32], strides = [1, 1]} : vector<8x96xf32> to vector<8x32xf32>
    %95 = arith.mulf %94, %77 : vector<8x32xf32>
    %96 = vector.extract_strided_slice %91 {offsets = [0, 0], sizes = [8, 32], strides = [1, 1]} : vector<8x96xf32> to vector<8x32xf32>
    %97 = arith.mulf %96, %93 : vector<8x32xf32>
    %98 = arith.addf %95, %97 : vector<8x32xf32>
    %99 = vector.extract_strided_slice %91 {offsets = [0, 64], sizes = [8, 32], strides = [1, 1]} : vector<8x96xf32> to vector<8x32xf32>
    %100 = math.tanh %98 : vector<8x32xf32>
    %101 = arith.mulf %99, %100 : vector<8x32xf32>
    %c24_28 = arith.constant 24 : index
    %c0_29 = arith.constant 0 : index
    %102 = vector.load %arg6[%c24_28, %c0_29] : memref<64x32xf32, #tpu.memory_space<vmem>>, vector<8x32xf32>
    tpu.vector_store %arg6[%c24_28, %c0_29], %101 {strides = array<i32>} : memref<64x32xf32, #tpu.memory_space<vmem>>, vector<8x32xf32>,
    %103 = vector.extract_strided_slice %16 {offsets = [32, 0], sizes = [8, 128], strides = [1, 1]} : vector<64x128xf32> to vector<8x128xf32>
    %104 = arith.truncf %101 : vector<8x32xf32> to vector<8x32xbf16>
    %cst_30 = arith.constant dense<0.000000e+00> : vector<8x128xf32>
    %105 = tpu.matmul %104, %5, %cst_30 {dimension_numbers = #tpu.dot_dimension_numbers<[1], [0], [0], [1], [0, 0, 1, 1], [], []>} : vector<8x32xbf16>, vector<32x128xbf16>, vector<8x128xf32> -> vector<8x128xf32>
    %106 = arith.addf %103, %105 : vector<8x128xf32>
    %107 = vector.extract_strided_slice %106 {offsets = [0, 0], sizes = [8, 96], strides = [1, 1]} : vector<8x128xf32> to vector<8x96xf32>
    %108 = arith.negf %107 : vector<8x96xf32>
    %109 = math.exp %108 : vector<8x96xf32>
    %cst_31 = arith.constant 1.000000e+00 : f32
    %110 = vector.broadcast %cst_31 : f32 to vector<8x96xf32>
    %111 = arith.addf %110, %109 : vector<8x96xf32>
    %112 = arith.divf %110, %111 : vector<8x96xf32>
    %113 = vector.extract_strided_slice %106 {offsets = [0, 96], sizes = [8, 32], strides = [1, 1]} : vector<8x128xf32> to vector<8x32xf32>
    %114 = math.tanh %113 : vector<8x32xf32>
    %115 = vector.extract_strided_slice %112 {offsets = [0, 32], sizes = [8, 32], strides = [1, 1]} : vector<8x96xf32> to vector<8x32xf32>
    %116 = arith.mulf %115, %98 : vector<8x32xf32>
    %117 = vector.extract_strided_slice %112 {offsets = [0, 0], sizes = [8, 32], strides = [1, 1]} : vector<8x96xf32> to vector<8x32xf32>
    %118 = arith.mulf %117, %114 : vector<8x32xf32>
    %119 = arith.addf %116, %118 : vector<8x32xf32>
    %120 = vector.extract_strided_slice %112 {offsets = [0, 64], sizes = [8, 32], strides = [1, 1]} : vector<8x96xf32> to vector<8x32xf32>
    %121 = math.tanh %119 : vector<8x32xf32>
    %122 = arith.mulf %120, %121 : vector<8x32xf32>
    %c32 = arith.constant 32 : index
    %c0_32 = arith.constant 0 : index
    %123 = vector.load %arg6[%c32, %c0_32] : memref<64x32xf32, #tpu.memory_space<vmem>>, vector<8x32xf32>
    tpu.vector_store %arg6[%c32, %c0_32], %122 {strides = array<i32>} : memref<64x32xf32, #tpu.memory_space<vmem>>, vector<8x32xf32>,
    %124 = vector.extract_strided_slice %16 {offsets = [40, 0], sizes = [8, 128], strides = [1, 1]} : vector<64x128xf32> to vector<8x128xf32>
    %125 = arith.truncf %122 : vector<8x32xf32> to vector<8x32xbf16>
    %cst_33 = arith.constant dense<0.000000e+00> : vector<8x128xf32>
    %126 = tpu.matmul %125, %5, %cst_33 {dimension_numbers = #tpu.dot_dimension_numbers<[1], [0], [0], [1], [0, 0, 1, 1], [], []>} : vector<8x32xbf16>, vector<32x128xbf16>, vector<8x128xf32> -> vector<8x128xf32>
    %127 = arith.addf %124, %126 : vector<8x128xf32>
    %128 = vector.extract_strided_slice %127 {offsets = [0, 0], sizes = [8, 96], strides = [1, 1]} : vector<8x128xf32> to vector<8x96xf32>
    %129 = arith.negf %128 : vector<8x96xf32>
    %130 = math.exp %129 : vector<8x96xf32>
    %cst_34 = arith.constant 1.000000e+00 : f32
    %131 = vector.broadcast %cst_34 : f32 to vector<8x96xf32>
    %132 = arith.addf %131, %130 : vector<8x96xf32>
    %133 = arith.divf %131, %132 : vector<8x96xf32>
    %134 = vector.extract_strided_slice %127 {offsets = [0, 96], sizes = [8, 32], strides = [1, 1]} : vector<8x128xf32> to vector<8x32xf32>
    %135 = math.tanh %134 : vector<8x32xf32>
    %136 = vector.extract_strided_slice %133 {offsets = [0, 32], sizes = [8, 32], strides = [1, 1]} : vector<8x96xf32> to vector<8x32xf32>
    %137 = arith.mulf %136, %119 : vector<8x32xf32>
    %138 = vector.extract_strided_slice %133 {offsets = [0, 0], sizes = [8, 32], strides = [1, 1]} : vector<8x96xf32> to vector<8x32xf32>
    %139 = arith.mulf %138, %135 : vector<8x32xf32>
    %140 = arith.addf %137, %139 : vector<8x32xf32>
    %141 = vector.extract_strided_slice %133 {offsets = [0, 64], sizes = [8, 32], strides = [1, 1]} : vector<8x96xf32> to vector<8x32xf32>
    %142 = math.tanh %140 : vector<8x32xf32>
    %143 = arith.mulf %141, %142 : vector<8x32xf32>
    %c40 = arith.constant 40 : index
    %c0_35 = arith.constant 0 : index
    %144 = vector.load %arg6[%c40, %c0_35] : memref<64x32xf32, #tpu.memory_space<vmem>>, vector<8x32xf32>
    tpu.vector_store %arg6[%c40, %c0_35], %143 {strides = array<i32>} : memref<64x32xf32, #tpu.memory_space<vmem>>, vector<8x32xf32>,
    %145 = vector.extract_strided_slice %16 {offsets = [48, 0], sizes = [8, 128], strides = [1, 1]} : vector<64x128xf32> to vector<8x128xf32>
    %146 = arith.truncf %143 : vector<8x32xf32> to vector<8x32xbf16>
    %cst_36 = arith.constant dense<0.000000e+00> : vector<8x128xf32>
    %147 = tpu.matmul %146, %5, %cst_36 {dimension_numbers = #tpu.dot_dimension_numbers<[1], [0], [0], [1], [0, 0, 1, 1], [], []>} : vector<8x32xbf16>, vector<32x128xbf16>, vector<8x128xf32> -> vector<8x128xf32>
    %148 = arith.addf %145, %147 : vector<8x128xf32>
    %149 = vector.extract_strided_slice %148 {offsets = [0, 0], sizes = [8, 96], strides = [1, 1]} : vector<8x128xf32> to vector<8x96xf32>
    %150 = arith.negf %149 : vector<8x96xf32>
    %151 = math.exp %150 : vector<8x96xf32>
    %cst_37 = arith.constant 1.000000e+00 : f32
    %152 = vector.broadcast %cst_37 : f32 to vector<8x96xf32>
    %153 = arith.addf %152, %151 : vector<8x96xf32>
    %154 = arith.divf %152, %153 : vector<8x96xf32>
    %155 = vector.extract_strided_slice %148 {offsets = [0, 96], sizes = [8, 32], strides = [1, 1]} : vector<8x128xf32> to vector<8x32xf32>
    %156 = math.tanh %155 : vector<8x32xf32>
    %157 = vector.extract_strided_slice %154 {offsets = [0, 32], sizes = [8, 32], strides = [1, 1]} : vector<8x96xf32> to vector<8x32xf32>
    %158 = arith.mulf %157, %140 : vector<8x32xf32>
    %159 = vector.extract_strided_slice %154 {offsets = [0, 0], sizes = [8, 32], strides = [1, 1]} : vector<8x96xf32> to vector<8x32xf32>
    %160 = arith.mulf %159, %156 : vector<8x32xf32>
    %161 = arith.addf %158, %160 : vector<8x32xf32>
    %162 = vector.extract_strided_slice %154 {offsets = [0, 64], sizes = [8, 32], strides = [1, 1]} : vector<8x96xf32> to vector<8x32xf32>
    %163 = math.tanh %161 : vector<8x32xf32>
    %164 = arith.mulf %162, %163 : vector<8x32xf32>
    %c48 = arith.constant 48 : index
    %c0_38 = arith.constant 0 : index
    %165 = vector.load %arg6[%c48, %c0_38] : memref<64x32xf32, #tpu.memory_space<vmem>>, vector<8x32xf32>
    tpu.vector_store %arg6[%c48, %c0_38], %164 {strides = array<i32>} : memref<64x32xf32, #tpu.memory_space<vmem>>, vector<8x32xf32>,
    %166 = vector.extract_strided_slice %16 {offsets = [56, 0], sizes = [8, 128], strides = [1, 1]} : vector<64x128xf32> to vector<8x128xf32>
    %167 = arith.truncf %164 : vector<8x32xf32> to vector<8x32xbf16>
    %cst_39 = arith.constant dense<0.000000e+00> : vector<8x128xf32>
    %168 = tpu.matmul %167, %5, %cst_39 {dimension_numbers = #tpu.dot_dimension_numbers<[1], [0], [0], [1], [0, 0, 1, 1], [], []>} : vector<8x32xbf16>, vector<32x128xbf16>, vector<8x128xf32> -> vector<8x128xf32>
    %169 = arith.addf %166, %168 : vector<8x128xf32>
    %170 = vector.extract_strided_slice %169 {offsets = [0, 0], sizes = [8, 96], strides = [1, 1]} : vector<8x128xf32> to vector<8x96xf32>
    %171 = arith.negf %170 : vector<8x96xf32>
    %172 = math.exp %171 : vector<8x96xf32>
    %cst_40 = arith.constant 1.000000e+00 : f32
    %173 = vector.broadcast %cst_40 : f32 to vector<8x96xf32>
    %174 = arith.addf %173, %172 : vector<8x96xf32>
    %175 = arith.divf %173, %174 : vector<8x96xf32>
    %176 = vector.extract_strided_slice %169 {offsets = [0, 96], sizes = [8, 32], strides = [1, 1]} : vector<8x128xf32> to vector<8x32xf32>
    %177 = math.tanh %176 : vector<8x32xf32>
    %178 = vector.extract_strided_slice %175 {offsets = [0, 32], sizes = [8, 32], strides = [1, 1]} : vector<8x96xf32> to vector<8x32xf32>
    %179 = arith.mulf %178, %161 : vector<8x32xf32>
    %180 = vector.extract_strided_slice %175 {offsets = [0, 0], sizes = [8, 32], strides = [1, 1]} : vector<8x96xf32> to vector<8x32xf32>
    %181 = arith.mulf %180, %177 : vector<8x32xf32>
    %182 = arith.addf %179, %181 : vector<8x32xf32>
    %183 = vector.extract_strided_slice %175 {offsets = [0, 64], sizes = [8, 32], strides = [1, 1]} : vector<8x96xf32> to vector<8x32xf32>
    %184 = math.tanh %182 : vector<8x32xf32>
    %185 = arith.mulf %183, %184 : vector<8x32xf32>
    %c56_41 = arith.constant 56 : index
    %c0_42 = arith.constant 0 : index
    %186 = vector.load %arg6[%c56_41, %c0_42] : memref<64x32xf32, #tpu.memory_space<vmem>>, vector<8x32xf32>
    tpu.vector_store %arg6[%c56_41, %c0_42], %185 {strides = array<i32>} : memref<64x32xf32, #tpu.memory_space<vmem>>, vector<8x32xf32>,
    %c0_43 = arith.constant 0 : index
    %c0_44 = arith.constant 0 : index
    %187 = vector.load %arg6[%c0_43, %c0_44] : memref<64x32xf32, #tpu.memory_space<vmem>>, vector<64x32xf32>
    %cst_45 = arith.constant dense<0.000000e+00> : vector<64x7xf32>
    %188 = tpu.matmul %187, %6, %cst_45 {dimension_numbers = #tpu.dot_dimension_numbers<[1], [0], [0], [1], [0, 0, 1, 1], [], []>} : vector<64x32xf32>, vector<32x7xf32>, vector<64x7xf32> -> vector<64x7xf32>
    %189 = vector.broadcast %7 : vector<1x7xf32> to vector<64x7xf32>
    %190 = arith.addf %188, %189 : vector<64x7xf32>
    %191 = vector.extract_strided_slice %190 {offsets = [0, 0], sizes = [64, 6], strides = [1, 1]} : vector<64x7xf32> to vector<64x6xf32>
    %192 = vector.extract_strided_slice %190 {offsets = [0, 6], sizes = [64, 1], strides = [1, 1]} : vector<64x7xf32> to vector<64x1xf32>
    %cst_46 = arith.constant dense<0xFF800000> : vector<64xf32>
    %193 = vector.multi_reduction <maximumf>, %191, %cst_46 [1] : vector<64x6xf32> to vector<64xf32>
    %194 = vector.shape_cast %193 : vector<64xf32> to vector<64x1xf32>
    %195 = vector.broadcast %194 : vector<64x1xf32> to vector<64x6xf32>
    %196 = arith.subf %191, %195 : vector<64x6xf32>
    %197 = math.exp %196 : vector<64x6xf32>
    %cst_47 = arith.constant dense<0.000000e+00> : vector<64xf32>
    %198 = vector.multi_reduction <add>, %197, %cst_47 [1] : vector<64x6xf32> to vector<64xf32>
    %199 = vector.shape_cast %198 : vector<64xf32> to vector<64x1xf32>
    %200 = math.log %199 : vector<64x1xf32>
    %201 = vector.broadcast %200 : vector<64x1xf32> to vector<64x6xf32>
    %202 = arith.subf %196, %201 : vector<64x6xf32>
    %203 = math.exp %202 : vector<64x6xf32>
    %204 = arith.mulf %203, %202 : vector<64x6xf32>
    %cst_48 = arith.constant dense<0.000000e+00> : vector<64xf32>
    %205 = vector.multi_reduction <add>, %204, %cst_48 [1] : vector<64x6xf32> to vector<64xf32>
    %206 = vector.shape_cast %205 : vector<64xf32> to vector<64x1xf32>
    %cst_49 = arith.constant 0.000000e+00 : f32
    %207 = vector.broadcast %cst_49 : f32 to vector<64x1xf32>
    %208 = arith.subf %207, %206 : vector<64x1xf32>
    %209 = tpu.iota {dimensions = array<i32: 1>} : vector<64x6xi32>
    %c0_50 = arith.constant 0 : index
    %c0_51 = arith.constant 0 : index
    %210 = vector.load %arg3[%c0_50, %c0_51] : memref<64x1xi32, #tpu.memory_space<vmem>>, vector<64x1xi32>
    %211 = vector.broadcast %210 : vector<64x1xi32> to vector<64x6xi32>
    %212 = arith.cmpi eq, %209, %211 : vector<64x6xi32>
    %213 = arith.extui %212 : vector<64x6xi1> to vector<64x6xi32>
    %214 = arith.sitofp %213 : vector<64x6xi32> to vector<64x6xf32>
    %215 = arith.mulf %202, %214 : vector<64x6xf32>
    %cst_52 = arith.constant dense<0.000000e+00> : vector<64xf32>
    %216 = vector.multi_reduction <add>, %215, %cst_52 [1] : vector<64x6xf32> to vector<64xf32>
    %217 = vector.shape_cast %216 : vector<64xf32> to vector<64x1xf32>
    %c0_53 = arith.constant 0 : index
    %c0_54 = arith.constant 0 : index
    %218 = vector.load %arg5[%c0_53, %c0_54] : memref<64x9xf32, #tpu.memory_space<vmem>>, vector<64x6xf32>
    tpu.vector_store %arg5[%c0_53, %c0_54], %202 {strides = array<i32>} : memref<64x9xf32, #tpu.memory_space<vmem>>, vector<64x6xf32>,
    %c0_55 = arith.constant 0 : index
    %c6 = arith.constant 6 : index
    %219 = vector.load %arg5[%c0_55, %c6] : memref<64x9xf32, #tpu.memory_space<vmem>>, vector<64x1xf32>
    tpu.vector_store %arg5[%c0_55, %c6], %217 {strides = array<i32>} : memref<64x9xf32, #tpu.memory_space<vmem>>, vector<64x1xf32>,
    %c0_56 = arith.constant 0 : index
    %c7 = arith.constant 7 : index
    %220 = vector.load %arg5[%c0_56, %c7] : memref<64x9xf32, #tpu.memory_space<vmem>>, vector<64x1xf32>
    tpu.vector_store %arg5[%c0_56, %c7], %208 {strides = array<i32>} : memref<64x9xf32, #tpu.memory_space<vmem>>, vector<64x1xf32>,
    %c0_57 = arith.constant 0 : index
    %c8_58 = arith.constant 8 : index
    %221 = vector.load %arg5[%c0_57, %c8_58] : memref<64x9xf32, #tpu.memory_space<vmem>>, vector<64x1xf32>
    tpu.vector_store %arg5[%c0_57, %c8_58], %192 {strides = array<i32>} : memref<64x9xf32, #tpu.memory_space<vmem>>, vector<64x1xf32>,
    return
  }
}

</mosaic_0001>

<llo_original>
// kernel: tpu_custom_call.1
$region0: #{tpu_custom_call.1}
  #allocation0 [shape = 'u32[]', space=smem, size = 0x4, offset = 0x4, fixed_abs, tag = 'smem constant byte address 0x4 - core index']
  #allocation1 [shape = 'u32[144,128]{1,0:T(1,128)}', space=vmem, size = 0x12000, scoped, tag = 'internal scratch']
  #allocation2 [shape = 'f32[64,32]{1,0:T(8,128)}', space=vmem, size = 0x8000, scoped, tag = 'scratch operand']
  %s0 = inlined_call_operand.vmem [shape: f32[64,16], index: 0, kind: input, shape index: {}]
  %s1 = inlined_call_operand.vmem [shape: f32[8,32], index: 1, kind: input, shape index: {}]
  %s2 = inlined_call_operand.vmem [shape: f32[8,32], index: 2, kind: input, shape index: {}]
  %s3 = inlined_call_operand.vmem [shape: s32[64,1], index: 3, kind: input, shape index: {}]
  %s4 = inlined_call_operand.vmem [shape: f32[136,128], index: 4, kind: input, shape index: {}]
  %s5 = inlined_call_operand.vmem [shape: f32[64,9], index: 5, kind: output, shape index: {}]
  %s6 = sld [smem:[#allocation0]]
  $region30: #{tpu_custom_call.1} parent=0
    _
  %s8 = ssub.s32 1, %s6
  %s9 = scalar_select 0, %s8, %s6
  // Predicated region
  $region2: #{tpu_custom_call.1} parent=0 // pred_check
    _
  $region3: #{tpu_custom_call.1} parent=0 // pred_check_branch
    %11 = sbr.rel (0) target = $region5
  $region4: #{tpu_custom_call.1} parent=0 // pred_region
    _
  $region5: #{tpu_custom_call.1} parent=0 // pred_fallthru
    _
  // Predicated region
  $region6: #{tpu_custom_call.1} parent=0 // pred_check
    _
  $region7: #{tpu_custom_call.1} parent=0 // pred_check_branch
    %13 = sbr.rel (0) target = $region9
  $region8: #{tpu_custom_call.1} parent=0 // pred_region
    _
  $region9: #{tpu_custom_call.1} parent=0 // pred_fallthru
    _
  // Predicated region
  $region10: #{tpu_custom_call.1} parent=0 // pred_check
    _
  $region11: #{tpu_custom_call.1} parent=0 // pred_check_branch
    %15 = sbr.rel (0) target = $region13
  $region12: #{tpu_custom_call.1} parent=0 // pred_region
    _
  $region13: #{tpu_custom_call.1} parent=0 // pred_fallthru
    _
  // Predicated region
  $region14: #{tpu_custom_call.1} parent=0 // pred_check
    _
  $region15: #{tpu_custom_call.1} parent=0 // pred_check_branch
    %17 = sbr.rel (0) target = $region17
  $region16: #{tpu_custom_call.1} parent=0 // pred_region
    _
  $region17: #{tpu_custom_call.1} parent=0 // pred_fallthru
    _
  // Predicated region
  $region18: #{tpu_custom_call.1} parent=0 // pred_check
    _
  $region19: #{tpu_custom_call.1} parent=0 // pred_check_branch
    %19 = sbr.rel (0) target = $region21
  $region20: #{tpu_custom_call.1} parent=0 // pred_region
    _
  $region21: #{tpu_custom_call.1} parent=0 // pred_fallthru
    _
  %v21 = vld [vmem:[%s4] sm:$0xff]
  %v22 = vld [vmem:[%s4 + $0x8] sm:$0xff]
  %v23 = vld [vmem:[%s4 + $0x10] sm:$0x1]
  %v24 = vld [vmem:[%s4 + $0x18] sm:$0xff]
  %v25 = vld [vmem:[%s4 + $0x20] sm:$0xff]
  %v26 = vld [vmem:[%s4 + $0x28] sm:$0xff]
  %v27 = vld [vmem:[%s4 + $0x30] sm:$0xff]
  %v28 = vld [vmem:[%s4 + $0x58] sm:$0x1]
  %v29 = vld [vmem:[%s4 + $0x38] sm:$0xff]
  %v30 = vld [vmem:[%s4 + $0x40] sm:$0xff]
  %v31 = vld [vmem:[%s4 + $0x48] sm:$0xff]
  %v32 = vld [vmem:[%s4 + $0x50] sm:$0xff]
  %v33 = vpack.c.bf16 %v30, %v29
  %v34 = vpack.c.bf16 %v32, %v31
  %v35 = vld [vmem:[%s4 + $0x60] sm:$0xff]
  %v36 = vld [vmem:[%s4 + $0x68] sm:$0xff]
  %v37 = vld [vmem:[%s4 + $0x70] sm:$0xff]
  %v38 = vld [vmem:[%s4 + $0x78] sm:$0xff]
  %v39 = vld [vmem:[%s4 + $0x80] sm:$0x1]
  %v40 = vld [vmem:[%s0] sm:$0xff]
  %v41 = vld [vmem:[%s0 + $0x8] sm:$0xff]
  %v42 = vld [vmem:[%s0 + $0x10] sm:$0xff]
  %v43 = vld [vmem:[%s0 + $0x18] sm:$0xff]
  %v44 = vld [vmem:[%s0 + $0x20] sm:$0xff]
  %v45 = vld [vmem:[%s0 + $0x28] sm:$0xff]
  %v46 = vld [vmem:[%s0 + $0x30] sm:$0xff]
  %v47 = vld [vmem:[%s0 + $0x38] sm:$0xff]
  %v48 = vlaneseq
  %v49 = vshrl.u32 %v48, 7
  %v50 = vsub.s32 0, %v49
  %v51 = vrot.slane %v23, %v50
  %vm52 = vcmask 130048
  %v54 = vsel %vm52, %v40, 0
  %v57 = vsel %vm52, %v41, 0
  %v60 = vsel %vm52, %v42, 0
  %v63 = vsel %vm52, %v43, 0
  %v66 = vsel %vm52, %v44, 0
  %v69 = vsel %vm52, %v45, 0
  %v72 = vsel %vm52, %v46, 0
  %v75 = vsel %vm52, %v47, 0
  %77 = vmatprep.subr.mxu0 0.0
  %78 = vmatpush1.msra.mxu0 %v21
  %79 = vmatprep.subr.mxu0 0.0
  %80 = vmatpush1.msra.mxu0 %v22
  %81 = vmatprep.subr.mxu0 0.0
  %82 = vmatpush1.msra.mxu0 0.0
  %83 = vmatprep.subr.mxu0 0.0
  %84 = vmatpush1.msra.mxu0 0.0
  %85 = vmatprep.subr.mxu0 0.0
  %86 = vmatpush1.msra.mxu0 0.0
  %87 = vmatprep.subr.mxu0 0.0
  %88 = vmatpush1.msra.mxu0 0.0
  %89 = vmatprep.subr.mxu0 0.0
  %90 = vmatpush1.msra.mxu0 0.0
  %91 = vmatprep.subr.mxu0 0.0
  %92 = vmatpush1.msra.mxu0 0.0
  %93 = vmatprep.subr.mxu0 0.0
  %94 = vmatpush1.msra.mxu0 0.0
  %95 = vmatprep.subr.mxu0 0.0
  %96 = vmatpush1.msra.mxu0 0.0
  %97 = vmatprep.subr.mxu0 0.0
  %98 = vmatpush1.msra.mxu0 0.0
  %99 = vmatprep.subr.mxu0 0.0
  %100 = vmatpush1.msra.mxu0 0.0
  %101 = vmatprep.subr.mxu0 0.0
  %102 = vmatpush1.msra.mxu0 0.0
  %103 = vmatprep.subr.mxu0 0.0
  %104 = vmatpush1.msra.mxu0 0.0
  %105 = vmatprep.subr.mxu0 0.0
  %106 = vmatpush1.msra.mxu0 0.0
  %107 = vmatprep.subr.mxu0 0.0
  %108 = vmatpush1.msra.mxu0 0.0
  %109 = vmatprep.subr.mxu0 0.0
  %110 = vmatpush1.msra.mxu0 0.0
  %111 = vmatprep.subr.mxu0 0.0
  %112 = vmatpush1.msra.mxu0 0.0
  %113 = vmatprep.subr.mxu0 0.0
  %114 = vmatpush1.msra.mxu0 0.0
  %115 = vmatprep.subr.mxu0 0.0
  %116 = vmatpush1.msra.mxu0 0.0
  %117 = vmatprep.subr.mxu0 0.0
  %118 = vmatpush1.msra.mxu0 0.0
  %119 = vmatprep.subr.mxu0 0.0
  %120 = vmatpush1.msra.mxu0 0.0
  %121 = vmatprep.subr.mxu0 0.0
  %122 = vmatpush1.msra.mxu0 0.0
  %123 = vmatprep.subr.mxu0 0.0
  %124 = vmatpush1.msra.mxu0 0.0
  %125 = vmatprep.subr.mxu0 0.0
  %126 = vmatpush1.msra.mxu0 0.0
  %127 = vmatprep.subr.mxu0 0.0
  %128 = vmatpush1.msra.mxu0 0.0
  %129 = vmatprep.subr.mxu0 0.0
  %130 = vmatpush1.msra.mxu0 0.0
  %131 = vmatprep.subr.mxu0 0.0
  %132 = vmatpush1.msra.mxu0 0.0
  %133 = vmatprep.subr.mxu0 0.0
  %134 = vmatpush1.msra.mxu0 0.0
  %135 = vmatprep.subr.mxu0 0.0
  %136 = vmatpush1.msra.mxu0 0.0
  %137 = vmatprep.subr.mxu0 0.0
  %138 = vmatpush1.msra.mxu0 0.0
  %139 = vmatprep.subr.mxu0 0.0
  %140 = vmatpush1.msra.mxu0 0.0
  %141 = vmatprep.mubr.f32.mxu0 0.0
  %142 = vmatmul.mubr.f32.gmra.mrb[0].mxu0 %v54
  %v143 = vpop.f32.mrb[0].mxu0
  %v144 = vadd.f32 %v51, %v143
  %v145 = vpop.f32.mrb[0].mxu0
  %146 = vmatprep.mubr.f32.mxu0 0.0
  %147 = vmatmul.mubr.f32.gmra.mrb[0].mxu0 %v57
  %v148 = vpop.f32.mrb[0].mxu0
  %v149 = vadd.f32 %v51, %v148
  %v150 = vpop.f32.mrb[0].mxu0
  %151 = vmatprep.mubr.f32.mxu0 0.0
  %152 = vmatmul.mubr.f32.gmra.mrb[0].mxu0 %v60
  %v153 = vpop.f32.mrb[0].mxu0
  %v154 = vadd.f32 %v51, %v153
  %v155 = vpop.f32.mrb[0].mxu0
  %156 = vmatprep.mubr.f32.mxu0 0.0
  %157 = vmatmul.mubr.f32.gmra.mrb[0].mxu0 %v63
  %v158 = vpop.f32.mrb[0].mxu0
  %v159 = vadd.f32 %v51, %v158
  %v160 = vpop.f32.mrb[0].mxu0
  %161 = vmatprep.mubr.f32.mxu0 0.0
  %162 = vmatmul.mubr.f32.gmra.mrb[0].mxu0 %v66
  %v163 = vpop.f32.mrb[0].mxu0
  %v164 = vadd.f32 %v51, %v163
  %v165 = vpop.f32.mrb[0].mxu0
  %166 = vmatprep.mubr.f32.mxu0 0.0
  %167 = vmatmul.mubr.f32.gmra.mrb[0].mxu0 %v69
  %v168 = vpop.f32.mrb[0].mxu0
  %v169 = vadd.f32 %v51, %v168
  %v170 = vpop.f32.mrb[0].mxu0
  %171 = vmatprep.mubr.f32.mxu0 0.0
  %172 = vmatmul.mubr.f32.gmra.mrb[0].mxu0 %v72
  %v173 = vpop.f32.mrb[0].mxu0
  %v174 = vadd.f32 %v51, %v173
  %v175 = vpop.f32.mrb[0].mxu0
  %176 = vmatprep.mubr.f32.mxu0 0.0
  %177 = vmatmul.mubr.f32.gmra.mrb[0].mxu0 %v75
  %v178 = vpop.f32.mrb[0].mxu0
  %v179 = vadd.f32 %v51, %v178
  %v180 = vpop.f32.mrb[0].mxu0
  %181 = vdwg.mxu0
  %v182 = vmax.f32 %v144, 0.0
  %v183 = vmax.f32 %v149, 0.0
  %v184 = vmax.f32 %v154, 0.0
  %v185 = vmax.f32 %v159, 0.0
  %v186 = vmax.f32 %v164, 0.0
  %v187 = vmax.f32 %v169, 0.0
  %v188 = vmax.f32 %v174, 0.0
  %v189 = vmax.f32 %v179, 0.0
  %v190 = vlaneseq
  %v191 = vshrl.u32 %v190, 7
  %v192 = vsub.s32 0, %v191
  %v193 = vrot.slane %v28, %v192
  %vm194 = vcmask 261120
  %v196 = vsel %vm194, %v182, 0
  %v199 = vsel %vm194, %v183, 0
  %v202 = vsel %vm194, %v184, 0
  %v205 = vsel %vm194, %v185, 0
  %v208 = vsel %vm194, %v186, 0
  %v211 = vsel %vm194, %v187, 0
  %v214 = vsel %vm194, %v188, 0
  %v217 = vsel %vm194, %v189, 0
  %219 = vmatprep.subr.mxu0 0.0
  %220 = vmatpush1.msra.mxu0 %v24
  %221 = vmatprep.subr.mxu0 0.0
  %222 = vmatpush1.msra.mxu0 %v25
  %223 = vmatprep.subr.mxu0 0.0
  %224 = vmatpush1.msra.mxu0 %v26
  %225 = vmatprep.subr.mxu0 0.0
  %226 = vmatpush1.msra.mxu0 %v27
  %227 = vmatprep.subr.mxu0 0.0
  %228 = vmatpush1.msra.mxu0 0.0
  %229 = vmatprep.subr.mxu0 0.0
  %230 = vmatpush1.msra.mxu0 0.0
  %231 = vmatprep.subr.mxu0 0.0
  %232 = vmatpush1.msra.mxu0 0.0
  %233 = vmatprep.subr.mxu0 0.0
  %234 = vmatpush1.msra.mxu0 0.0
  %235 = vmatprep.subr.mxu0 0.0
  %236 = vmatpush1.msra.mxu0 0.0
  %237 = vmatprep.subr.mxu0 0.0
  %238 = vmatpush1.msra.mxu0 0.0
  %239 = vmatprep.subr.mxu0 0.0
  %240 = vmatpush1.msra.mxu0 0.0
  %241 = vmatprep.subr.mxu0 0.0
  %242 = vmatpush1.msra.mxu0 0.0
  %243 = vmatprep.subr.mxu0 0.0
  %244 = vmatpush1.msra.mxu0 0.0
  %245 = vmatprep.subr.mxu0 0.0
  %246 = vmatpush1.msra.mxu0 0.0
  %247 = vmatprep.subr.mxu0 0.0
  %248 = vmatpush1.msra.mxu0 0.0
  %249 = vmatprep.subr.mxu0 0.0
  %250 = vmatpush1.msra.mxu0 0.0
  %251 = vmatprep.subr.mxu0 0.0
  %252 = vmatpush1.msra.mxu0 0.0
  %253 = vmatprep.subr.mxu0 0.0
  %254 = vmatpush1.msra.mxu0 0.0
  %255 = vmatprep.subr.mxu0 0.0
  %256 = vmatpush1.msra.mxu0 0.0
  %257 = vmatprep.subr.mxu0 0.0
  %258 = vmatpush1.msra.mxu0 0.0
  %259 = vmatprep.subr.mxu0 0.0
  %260 = vmatpush1.msra.mxu0 0.0
  %261 = vmatprep.subr.mxu0 0.0
  %262 = vmatpush1.msra.mxu0 0.0
  %263 = vmatprep.subr.mxu0 0.0
  %264 = vmatpush1.msra.mxu0 0.0
  %265 = vmatprep.subr.mxu0 0.0
  %266 = vmatpush1.msra.mxu0 0.0
  %267 = vmatprep.subr.mxu0 0.0
  %268 = vmatpush1.msra.mxu0 0.0
  %269 = vmatprep.subr.mxu0 0.0
  %270 = vmatpush1.msra.mxu0 0.0
  %271 = vmatprep.subr.mxu0 0.0
  %272 = vmatpush1.msra.mxu0 0.0
  %273 = vmatprep.subr.mxu0 0.0
  %274 = vmatpush1.msra.mxu0 0.0
  %275 = vmatprep.subr.mxu0 0.0
  %276 = vmatpush1.msra.mxu0 0.0
  %277 = vmatprep.subr.mxu0 0.0
  %278 = vmatpush1.msra.mxu0 0.0
  %279 = vmatprep.subr.mxu0 0.0
  %280 = vmatpush1.msra.mxu0 0.0
  %281 = vmatprep.subr.mxu0 0.0
  %282 = vmatpush1.msra.mxu0 0.0
  %283 = vmatprep.mubr.f32.mxu0 0.0
  %284 = vmatmul.mubr.f32.gmra.mrb[0].mxu0 %v196
  %v285 = vpop.f32.mrb[0].mxu0
  %v286 = vadd.f32 %v193, %v285
  %v287 = vpop.f32.mrb[0].mxu0
  %288 = vmatprep.mubr.f32.mxu0 0.0
  %289 = vmatmul.mubr.f32.gmra.mrb[0].mxu0 %v199
  %v290 = vpop.f32.mrb[0].mxu0
  %v291 = vadd.f32 %v193, %v290
  %v292 = vpop.f32.mrb[0].mxu0
  %293 = vmatprep.mubr.f32.mxu0 0.0
  %294 = vmatmul.mubr.f32.gmra.mrb[0].mxu0 %v202
  %v295 = vpop.f32.mrb[0].mxu0
  %v296 = vadd.f32 %v193, %v295
  %v297 = vpop.f32.mrb[0].mxu0
  %298 = vmatprep.mubr.f32.mxu0 0.0
  %299 = vmatmul.mubr.f32.gmra.mrb[0].mxu0 %v205
  %v300 = vpop.f32.mrb[0].mxu0
  %v301 = vadd.f32 %v193, %v300
  %v302 = vpop.f32.mrb[0].mxu0
  %303 = vmatprep.mubr.f32.mxu0 0.0
  %304 = vmatmul.mubr.f32.gmra.mrb[0].mxu0 %v208
  %v305 = vpop.f32.mrb[0].mxu0
  %v306 = vadd.f32 %v193, %v305
  %v307 = vpop.f32.mrb[0].mxu0
  %308 = vmatprep.mubr.f32.mxu0 0.0
  %309 = vmatmul.mubr.f32.gmra.mrb[0].mxu0 %v211
  %v310 = vpop.f32.mrb[0].mxu0
  %v311 = vadd.f32 %v193, %v310
  %v312 = vpop.f32.mrb[0].mxu0
  %313 = vmatprep.mubr.f32.mxu0 0.0
  %314 = vmatmul.mubr.f32.gmra.mrb[0].mxu0 %v214
  %v315 = vpop.f32.mrb[0].mxu0
  %v316 = vadd.f32 %v193, %v315
  %v317 = vpop.f32.mrb[0].mxu0
  %318 = vmatprep.mubr.f32.mxu0 0.0
  %319 = vmatmul.mubr.f32.gmra.mrb[0].mxu0 %v217
  %v320 = vpop.f32.mrb[0].mxu0
  %v321 = vadd.f32 %v193, %v320
  %v322 = vpop.f32.mrb[0].mxu0
  %323 = vdwg.mxu0
  %v324 = vld [vmem:[%s1] sm:$0xff]
  %v325 = vld [vmem:[%s2] sm:$0xff]
  %v326 = vpack.c.bf16 %v324, %v324
  %v328 = vsel %vm194, %v326, 0
  %330 = vmatprep.subr.bf16.mxu0 0
  %331 = vmatpush1.bf16.msra.mxu0 %v33
  %332 = vmatprep.subr.bf16.mxu0 0
  %333 = vmatpush1.bf16.msra.mxu0 %v34
  %334 = vmatprep.subr.bf16.mxu0 0
  %335 = vmatpush1.bf16.msra.mxu0 0
  %336 = vmatprep.subr.bf16.mxu0 0
  %337 = vmatpush1.bf16.msra.mxu0 0
  %338 = vmatprep.subr.bf16.mxu0 0
  %339 = vmatpush1.bf16.msra.mxu0 0
  %340 = vmatprep.subr.bf16.mxu0 0
  %341 = vmatpush1.bf16.msra.mxu0 0
  %342 = vmatprep.subr.bf16.mxu0 0
  %343 = vmatpush1.bf16.msra.mxu0 0
  %344 = vmatprep.subr.bf16.mxu0 0
  %345 = vmatpush1.bf16.msra.mxu0 0
  %346 = vmatprep.subr.bf16.mxu0 0
  %347 = vmatpush1.bf16.msra.mxu0 0
  %348 = vmatprep.subr.bf16.mxu0 0
  %349 = vmatpush1.bf16.msra.mxu0 0
  %350 = vmatprep.subr.bf16.mxu0 0
  %351 = vmatpush1.bf16.msra.mxu0 0
  %352 = vmatprep.subr.bf16.mxu0 0
  %353 = vmatpush1.bf16.msra.mxu0 0
  %354 = vmatprep.subr.bf16.mxu0 0
  %355 = vmatpush1.bf16.msra.mxu0 0
  %356 = vmatprep.subr.bf16.mxu0 0
  %357 = vmatpush1.bf16.msra.mxu0 0
  %358 = vmatprep.subr.bf16.mxu0 0
  %359 = vmatpush1.bf16.msra.mxu0 0
  %360 = vmatprep.subr.bf16.mxu0 0
  %361 = vmatpush1.bf16.msra.mxu0 0
  %362 = vmatprep.mubr.bf16.mxu0 0
  %363 = vmatmul.mubr.bf16.gmra.mrb[0].mxu0 %v328
  %v364 = vpop.f32.mrb[0].mxu0
  %v365 = vadd.f32 0.0, %v364
  %v366 = vpop.f32.mrb[0].mxu0
  %v367 = vpop.f32.mrb[0].mxu0
  %v368 = vpop.f32.mrb[0].mxu0
  %369 = vdwg.mxu0
  %v370 = vadd.f32 %v286, %v365
  %v371 = vxor.u32 %v370, 2147483648
  %v372 = vmul.f32 %v371, 1.442695
  %v373 = vpow.pop %v372
  %v374 = vadd.f32 %v373, 1.0
  %v375 = vrcp.pop %v374
  %v376 = vmul.f32 1.0, %v375
  %v377 = vtanh.pop %v370
  %379 = vrot.lane.b32.xlu0 %v325, 32
  %v380 = vpop.permute.xlu0 %379
  %v382 = vmul.f32 %v376, %v380
  %384 = vrot.lane.b32.xlu0 %v377, 32
  %v385 = vpop.permute.xlu0 %384
  %v387 = vmul.f32 %v376, %v385
  %389 = vrot.lane.b32.xlu0 %v387, 32
  %v390 = vpop.permute.xlu0 %389
  %v392 = vadd.f32 %v382, %v390
  %v393 = vtanh.pop %v392
  %395 = vrot.lane.b32.xlu0 %v393, 32
  %v396 = vpop.permute.xlu0 %395
  %v398 = vmul.f32 %v376, %v396
  %400 = vrot.lane.b32.xlu0 %v398, 64
  %v401 = vpop.permute.xlu0 %400
  %403 = vst.msk [vmem:[#allocation2] sm:$0xff] %vm194, %v401
  %v404 = vpack.c.bf16 %v398, %v398
  %406 = vrot.lane.b32.xlu0 %v404, 64
  %v407 = vpop.permute.xlu0 %406
  %v409 = vsel %vm194, %v407, 0
  %411 = vmatprep.subr.bf16.mxu0 0
  %412 = vmatpush1.bf16.msra.mxu0 %v33
  %413 = vmatprep.subr.bf16.mxu0 0
  %414 = vmatpush1.bf16.msra.mxu0 %v34
  %415 = vmatprep.subr.bf16.mxu0 0
  %416 = vmatpush1.bf16.msra.mxu0 0
  %417 = vmatprep.subr.bf16.mxu0 0
  %418 = vmatpush1.bf16.msra.mxu0 0
  %419 = vmatprep.subr.bf16.mxu0 0
  %420 = vmatpush1.bf16.msra.mxu0 0
  %421 = vmatprep.subr.bf16.mxu0 0
  %422 = vmatpush1.bf16.msra.mxu0 0
  %423 = vmatprep.subr.bf16.mxu0 0
  %424 = vmatpush1.bf16.msra.mxu0 0
  %425 = vmatprep.subr.bf16.mxu0 0
  %426 = vmatpush1.bf16.msra.mxu0 0
  %427 = vmatprep.subr.bf16.mxu0 0
  %428 = vmatpush1.bf16.msra.mxu0 0
  %429 = vmatprep.subr.bf16.mxu0 0
  %430 = vmatpush1.bf16.msra.mxu0 0
  %431 = vmatprep.subr.bf16.mxu0 0
  %432 = vmatpush1.bf16.msra.mxu0 0
  %433 = vmatprep.subr.bf16.mxu0 0
  %434 = vmatpush1.bf16.msra.mxu0 0
  %435 = vmatprep.subr.bf16.mxu0 0
  %436 = vmatpush1.bf16.msra.mxu0 0
  %437 = vmatprep.subr.bf16.mxu0 0
  %438 = vmatpush1.bf16.msra.mxu0 0
  %439 = vmatprep.subr.bf16.mxu0 0
  %440 = vmatpush1.bf16.msra.mxu0 0
  %441 = vmatprep.subr.bf16.mxu0 0
  %442 = vmatpush1.bf16.msra.mxu0 0
  %443 = vmatprep.mubr.bf16.mxu0 0
  %444 = vmatmul.mubr.bf16.gmra.mrb[0].mxu0 %v409
  %v445 = vpop.f32.mrb[0].mxu0
  %v446 = vadd.f32 0.0, %v445
  %v447 = vpop.f32.mrb[0].mxu0
  %v448 = vpop.f32.mrb[0].mxu0
  %v449 = vpop.f32.mrb[0].mxu0
  %450 = vdwg.mxu0
  %v451 = vadd.f32 %v291, %v446
  %v452 = vxor.u32 %v451, 2147483648
  %v453 = vmul.f32 %v452, 1.442695
  %v454 = vpow.pop %v453
  %v455 = vadd.f32 %v454, 1.0
  %v456 = vrcp.pop %v455
  %v457 = vmul.f32 1.0, %v456
  %v458 = vtanh.pop %v451
  %v459 = vmul.f32 %v457, %v392
  %461 = vrot.lane.b32.xlu0 %v458, 32
  %v462 = vpop.permute.xlu0 %461
  %v464 = vmul.f32 %v457, %v462
  %466 = vrot.lane.b32.xlu0 %v464, 32
  %v467 = vpop.permute.xlu0 %466
  %v469 = vadd.f32 %v459, %v467
  %v470 = vtanh.pop %v469
  %472 = vrot.lane.b32.xlu0 %v470, 32
  %v473 = vpop.permute.xlu0 %472
  %v475 = vmul.f32 %v457, %v473
  %477 = vrot.lane.b32.xlu0 %v475, 64
  %v478 = vpop.permute.xlu0 %477
  %480 = vst.msk [vmem:[#allocation2 + $0x8] sm:$0xff] %vm194, %v478
  %v481 = vpack.c.bf16 %v475, %v475
  %483 = vrot.lane.b32.xlu0 %v481, 64
  %v484 = vpop.permute.xlu0 %483
  %v486 = vsel %vm194, %v484, 0
  %488 = vmatprep.subr.bf16.mxu0 0
  %489 = vmatpush1.bf16.msra.mxu0 %v33
  %490 = vmatprep.subr.bf16.mxu0 0
  %491 = vmatpush1.bf16.msra.mxu0 %v34
  %492 = vmatprep.subr.bf16.mxu0 0
  %493 = vmatpush1.bf16.msra.mxu0 0
  %494 = vmatprep.subr.bf16.mxu0 0
  %495 = vmatpush1.bf16.msra.mxu0 0
  %496 = vmatprep.subr.bf16.mxu0 0
  %497 = vmatpush1.bf16.msra.mxu0 0
  %498 = vmatprep.subr.bf16.mxu0 0
  %499 = vmatpush1.bf16.msra.mxu0 0
  %500 = vmatprep.subr.bf16.mxu0 0
  %501 = vmatpush1.bf16.msra.mxu0 0
  %502 = vmatprep.subr.bf16.mxu0 0
  %503 = vmatpush1.bf16.msra.mxu0 0
  %504 = vmatprep.subr.bf16.mxu0 0
  %505 = vmatpush1.bf16.msra.mxu0 0
  %506 = vmatprep.subr.bf16.mxu0 0
  %507 = vmatpush1.bf16.msra.mxu0 0
  %508 = vmatprep.subr.bf16.mxu0 0
  %509 = vmatpush1.bf16.msra.mxu0 0
  %510 = vmatprep.subr.bf16.mxu0 0
  %511 = vmatpush1.bf16.msra.mxu0 0
  %512 = vmatprep.subr.bf16.mxu0 0
  %513 = vmatpush1.bf16.msra.mxu0 0
  %514 = vmatprep.subr.bf16.mxu0 0
  %515 = vmatpush1.bf16.msra.mxu0 0
  %516 = vmatprep.subr.bf16.mxu0 0
  %517 = vmatpush1.bf16.msra.mxu0 0
  %518 = vmatprep.subr.bf16.mxu0 0
  %519 = vmatpush1.bf16.msra.mxu0 0
  %520 = vmatprep.mubr.bf16.mxu0 0
  %521 = vmatmul.mubr.bf16.gmra.mrb[0].mxu0 %v486
  %v522 = vpop.f32.mrb[0].mxu0
  %v523 = vadd.f32 0.0, %v522
  %v524 = vpop.f32.mrb[0].mxu0
  %v525 = vpop.f32.mrb[0].mxu0
  %v526 = vpop.f32.mrb[0].mxu0
  %527 = vdwg.mxu0
  %v528 = vadd.f32 %v296, %v523
  %v529 = vxor.u32 %v528, 2147483648
  %v530 = vmul.f32 %v529, 1.442695
  %v531 = vpow.pop %v530
  %v532 = vadd.f32 %v531, 1.0
  %v533 = vrcp.pop %v532
  %v534 = vmul.f32 1.0, %v533
  %v535 = vtanh.pop %v528
  %v536 = vmul.f32 %v534, %v469
  %538 = vrot.lane.b32.xlu0 %v535, 32
  %v539 = vpop.permute.xlu0 %538
  %v541 = vmul.f32 %v534, %v539
  %543 = vrot.lane.b32.xlu0 %v541, 32
  %v544 = vpop.permute.xlu0 %543
  %v546 = vadd.f32 %v536, %v544
  %v547 = vtanh.pop %v546
  %549 = vrot.lane.b32.xlu0 %v547, 32
  %v550 = vpop.permute.xlu0 %549
  %v552 = vmul.f32 %v534, %v550
  %554 = vrot.lane.b32.xlu0 %v552, 64
  %v555 = vpop.permute.xlu0 %554
  %557 = vst.msk [vmem:[#allocation2 + $0x10] sm:$0xff] %vm194, %v555
  %v558 = vpack.c.bf16 %v552, %v552
  %560 = vrot.lane.b32.xlu0 %v558, 64
  %v561 = vpop.permute.xlu0 %560
  %v563 = vsel %vm194, %v561, 0
  %565 = vmatprep.subr.bf16.mxu0 0
  %566 = vmatpush1.bf16.msra.mxu0 %v33
  %567 = vmatprep.subr.bf16.mxu0 0
  %568 = vmatpush1.bf16.msra.mxu0 %v34
  %569 = vmatprep.subr.bf16.mxu0 0
  %570 = vmatpush1.bf16.msra.mxu0 0
  %571 = vmatprep.subr.bf16.mxu0 0
  %572 = vmatpush1.bf16.msra.mxu0 0
  %573 = vmatprep.subr.bf16.mxu0 0
  %574 = vmatpush1.bf16.msra.mxu0 0
  %575 = vmatprep.subr.bf16.mxu0 0
  %576 = vmatpush1.bf16.msra.mxu0 0
  %577 = vmatprep.subr.bf16.mxu0 0
  %578 = vmatpush1.bf16.msra.mxu0 0
  %579 = vmatprep.subr.bf16.mxu0 0
  %580 = vmatpush1.bf16.msra.mxu0 0
  %581 = vmatprep.subr.bf16.mxu0 0
  %582 = vmatpush1.bf16.msra.mxu0 0
  %583 = vmatprep.subr.bf16.mxu0 0
  %584 = vmatpush1.bf16.msra.mxu0 0
  %585 = vmatprep.subr.bf16.mxu0 0
  %586 = vmatpush1.bf16.msra.mxu0 0
  %587 = vmatprep.subr.bf16.mxu0 0
  %588 = vmatpush1.bf16.msra.mxu0 0
  %589 = vmatprep.subr.bf16.mxu0 0
  %590 = vmatpush1.bf16.msra.mxu0 0
  %591 = vmatprep.subr.bf16.mxu0 0
  %592 = vmatpush1.bf16.msra.mxu0 0
  %593 = vmatprep.subr.bf16.mxu0 0
  %594 = vmatpush1.bf16.msra.mxu0 0
  %595 = vmatprep.subr.bf16.mxu0 0
  %596 = vmatpush1.bf16.msra.mxu0 0
  %597 = vmatprep.mubr.bf16.mxu0 0
  %598 = vmatmul.mubr.bf16.gmra.mrb[0].mxu0 %v563
  %v599 = vpop.f32.mrb[0].mxu0
  %v600 = vadd.f32 0.0, %v599
  %v601 = vpop.f32.mrb[0].mxu0
  %v602 = vpop.f32.mrb[0].mxu0
  %v603 = vpop.f32.mrb[0].mxu0
  %604 = vdwg.mxu0
  %v605 = vadd.f32 %v301, %v600
  %v606 = vxor.u32 %v605, 2147483648
  %v607 = vmul.f32 %v606, 1.442695
  %v608 = vpow.pop %v607
  %v609 = vadd.f32 %v608, 1.0
  %v610 = vrcp.pop %v609
  %v611 = vmul.f32 1.0, %v610
  %v612 = vtanh.pop %v605
  %v613 = vmul.f32 %v611, %v546
  %615 = vrot.lane.b32.xlu0 %v612, 32
  %v616 = vpop.permute.xlu0 %615
  %v618 = vmul.f32 %v611, %v616
  %620 = vrot.lane.b32.xlu0 %v618, 32
  %v621 = vpop.permute.xlu0 %620
  %v623 = vadd.f32 %v613, %v621
  %v624 = vtanh.pop %v623
  %626 = vrot.lane.b32.xlu0 %v624, 32
  %v627 = vpop.permute.xlu0 %626
  %v629 = vmul.f32 %v611, %v627
  %631 = vrot.lane.b32.xlu0 %v629, 64
  %v632 = vpop.permute.xlu0 %631
  %634 = vst.msk [vmem:[#allocation2 + $0x18] sm:$0xff] %vm194, %v632
  %v635 = vpack.c.bf16 %v629, %v629
  %637 = vrot.lane.b32.xlu0 %v635, 64
  %v638 = vpop.permute.xlu0 %637
  %v640 = vsel %vm194, %v638, 0
  %642 = vmatprep.subr.bf16.mxu0 0
  %643 = vmatpush1.bf16.msra.mxu0 %v33
  %644 = vmatprep.subr.bf16.mxu0 0
  %645 = vmatpush1.bf16.msra.mxu0 %v34
  %646 = vmatprep.subr.bf16.mxu0 0
  %647 = vmatpush1.bf16.msra.mxu0 0
  %648 = vmatprep.subr.bf16.mxu0 0
  %649 = vmatpush1.bf16.msra.mxu0 0
  %650 = vmatprep.subr.bf16.mxu0 0
  %651 = vmatpush1.bf16.msra.mxu0 0
  %652 = vmatprep.subr.bf16.mxu0 0
  %653 = vmatpush1.bf16.msra.mxu0 0
  %654 = vmatprep.subr.bf16.mxu0 0
  %655 = vmatpush1.bf16.msra.mxu0 0
  %656 = vmatprep.subr.bf16.mxu0 0
  %657 = vmatpush1.bf16.msra.mxu0 0
  %658 = vmatprep.subr.bf16.mxu0 0
  %659 = vmatpush1.bf16.msra.mxu0 0
  %660 = vmatprep.subr.bf16.mxu0 0
  %661 = vmatpush1.bf16.msra.mxu0 0
  %662 = vmatprep.subr.bf16.mxu0 0
  %663 = vmatpush1.bf16.msra.mxu0 0
  %664 = vmatprep.subr.bf16.mxu0 0
  %665 = vmatpush1.bf16.msra.mxu0 0
  %666 = vmatprep.subr.bf16.mxu0 0
  %667 = vmatpush1.bf16.msra.mxu0 0
  %668 = vmatprep.subr.bf16.mxu0 0
  %669 = vmatpush1.bf16.msra.mxu0 0
  %670 = vmatprep.subr.bf16.mxu0 0
  %671 = vmatpush1.bf16.msra.mxu0 0
  %672 = vmatprep.subr.bf16.mxu0 0
  %673 = vmatpush1.bf16.msra.mxu0 0
  %674 = vmatprep.mubr.bf16.mxu0 0
  %675 = vmatmul.mubr.bf16.gmra.mrb[0].mxu0 %v640
  %v676 = vpop.f32.mrb[0].mxu0
  %v677 = vadd.f32 0.0, %v676
  %v678 = vpop.f32.mrb[0].mxu0
  %v679 = vpop.f32.mrb[0].mxu0
  %v680 = vpop.f32.mrb[0].mxu0
  %681 = vdwg.mxu0
  %v682 = vadd.f32 %v306, %v677
  %v683 = vxor.u32 %v682, 2147483648
  %v684 = vmul.f32 %v683, 1.442695
  %v685 = vpow.pop %v684
  %v686 = vadd.f32 %v685, 1.0
  %v687 = vrcp.pop %v686
  %v688 = vmul.f32 1.0, %v687
  %v689 = vtanh.pop %v682
  %v690 = vmul.f32 %v688, %v623
  %692 = vrot.lane.b32.xlu0 %v689, 32
  %v693 = vpop.permute.xlu0 %692
  %v695 = vmul.f32 %v688, %v693
  %697 = vrot.lane.b32.xlu0 %v695, 32
  %v698 = vpop.permute.xlu0 %697
  %v700 = vadd.f32 %v690, %v698
  %v701 = vtanh.pop %v700
  %703 = vrot.lane.b32.xlu0 %v701, 32
  %v704 = vpop.permute.xlu0 %703
  %v706 = vmul.f32 %v688, %v704
  %708 = vrot.lane.b32.xlu0 %v706, 64
  %v709 = vpop.permute.xlu0 %708
  %711 = vst.msk [vmem:[#allocation2 + $0x20] sm:$0xff] %vm194, %v709
  %v712 = vpack.c.bf16 %v706, %v706
  %714 = vrot.lane.b32.xlu0 %v712, 64
  %v715 = vpop.permute.xlu0 %714
  %v717 = vsel %vm194, %v715, 0
  %719 = vmatprep.subr.bf16.mxu0 0
  %720 = vmatpush1.bf16.msra.mxu0 %v33
  %721 = vmatprep.subr.bf16.mxu0 0
  %722 = vmatpush1.bf16.msra.mxu0 %v34
  %723 = vmatprep.subr.bf16.mxu0 0
  %724 = vmatpush1.bf16.msra.mxu0 0
  %725 = vmatprep.subr.bf16.mxu0 0
  %726 = vmatpush1.bf16.msra.mxu0 0
  %727 = vmatprep.subr.bf16.mxu0 0
  %728 = vmatpush1.bf16.msra.mxu0 0
  %729 = vmatprep.subr.bf16.mxu0 0
  %730 = vmatpush1.bf16.msra.mxu0 0
  %731 = vmatprep.subr.bf16.mxu0 0
  %732 = vmatpush1.bf16.msra.mxu0 0
  %733 = vmatprep.subr.bf16.mxu0 0
  %734 = vmatpush1.bf16.msra.mxu0 0
  %735 = vmatprep.subr.bf16.mxu0 0
  %736 = vmatpush1.bf16.msra.mxu0 0
  %737 = vmatprep.subr.bf16.mxu0 0
  %738 = vmatpush1.bf16.msra.mxu0 0
  %739 = vmatprep.subr.bf16.mxu0 0
  %740 = vmatpush1.bf16.msra.mxu0 0
  %741 = vmatprep.subr.bf16.mxu0 0
  %742 = vmatpush1.bf16.msra.mxu0 0
  %743 = vmatprep.subr.bf16.mxu0 0
  %744 = vmatpush1.bf16.msra.mxu0 0
  %745 = vmatprep.subr.bf16.mxu0 0
  %746 = vmatpush1.bf16.msra.mxu0 0
  %747 = vmatprep.subr.bf16.mxu0 0
  %748 = vmatpush1.bf16.msra.mxu0 0
  %749 = vmatprep.subr.bf16.mxu0 0
  %750 = vmatpush1.bf16.msra.mxu0 0
  %751 = vmatprep.mubr.bf16.mxu0 0
  %752 = vmatmul.mubr.bf16.gmra.mrb[0].mxu0 %v717
  %v753 = vpop.f32.mrb[0].mxu0
  %v754 = vadd.f32 0.0, %v753
  %v755 = vpop.f32.mrb[0].mxu0
  %v756 = vpop.f32.mrb[0].mxu0
  %v757 = vpop.f32.mrb[0].mxu0
  %758 = vdwg.mxu0
  %v759 = vadd.f32 %v311, %v754
  %v760 = vxor.u32 %v759, 2147483648
  %v761 = vmul.f32 %v760, 1.442695
  %v762 = vpow.pop %v761
  %v763 = vadd.f32 %v762, 1.0
  %v764 = vrcp.pop %v763
  %v765 = vmul.f32 1.0, %v764
  %v766 = vtanh.pop %v759
  %v767 = vmul.f32 %v765, %v700
  %769 = vrot.lane.b32.xlu0 %v766, 32
  %v770 = vpop.permute.xlu0 %769
  %v772 = vmul.f32 %v765, %v770
  %774 = vrot.lane.b32.xlu0 %v772, 32
  %v775 = vpop.permute.xlu0 %774
  %v777 = vadd.f32 %v767, %v775
  %v778 = vtanh.pop %v777
  %780 = vrot.lane.b32.xlu0 %v778, 32
  %v781 = vpop.permute.xlu0 %780
  %v783 = vmul.f32 %v765, %v781
  %785 = vrot.lane.b32.xlu0 %v783, 64
  %v786 = vpop.permute.xlu0 %785
  %788 = vst.msk [vmem:[#allocation2 + $0x28] sm:$0xff] %vm194, %v786
  %v789 = vpack.c.bf16 %v783, %v783
  %791 = vrot.lane.b32.xlu0 %v789, 64
  %v792 = vpop.permute.xlu0 %791
  %v794 = vsel %vm194, %v792, 0
  %796 = vmatprep.subr.bf16.mxu0 0
  %797 = vmatpush1.bf16.msra.mxu0 %v33
  %798 = vmatprep.subr.bf16.mxu0 0
  %799 = vmatpush1.bf16.msra.mxu0 %v34
  %800 = vmatprep.subr.bf16.mxu0 0
  %801 = vmatpush1.bf16.msra.mxu0 0
  %802 = vmatprep.subr.bf16.mxu0 0
  %803 = vmatpush1.bf16.msra.mxu0 0
  %804 = vmatprep.subr.bf16.mxu0 0
  %805 = vmatpush1.bf16.msra.mxu0 0
  %806 = vmatprep.subr.bf16.mxu0 0
  %807 = vmatpush1.bf16.msra.mxu0 0
  %808 = vmatprep.subr.bf16.mxu0 0
  %809 = vmatpush1.bf16.msra.mxu0 0
  %810 = vmatprep.subr.bf16.mxu0 0
  %811 = vmatpush1.bf16.msra.mxu0 0
  %812 = vmatprep.subr.bf16.mxu0 0
  %813 = vmatpush1.bf16.msra.mxu0 0
  %814 = vmatprep.subr.bf16.mxu0 0
  %815 = vmatpush1.bf16.msra.mxu0 0
  %816 = vmatprep.subr.bf16.mxu0 0
  %817 = vmatpush1.bf16.msra.mxu0 0
  %818 = vmatprep.subr.bf16.mxu0 0
  %819 = vmatpush1.bf16.msra.mxu0 0
  %820 = vmatprep.subr.bf16.mxu0 0
  %821 = vmatpush1.bf16.msra.mxu0 0
  %822 = vmatprep.subr.bf16.mxu0 0
  %823 = vmatpush1.bf16.msra.mxu0 0
  %824 = vmatprep.subr.bf16.mxu0 0
  %825 = vmatpush1.bf16.msra.mxu0 0
  %826 = vmatprep.subr.bf16.mxu0 0
  %827 = vmatpush1.bf16.msra.mxu0 0
  %828 = vmatprep.mubr.bf16.mxu0 0
  %829 = vmatmul.mubr.bf16.gmra.mrb[0].mxu0 %v794
  %v830 = vpop.f32.mrb[0].mxu0
  %v831 = vadd.f32 0.0, %v830
  %v832 = vpop.f32.mrb[0].mxu0
  %v833 = vpop.f32.mrb[0].mxu0
  %v834 = vpop.f32.mrb[0].mxu0
  %835 = vdwg.mxu0
  %v836 = vadd.f32 %v316, %v831
  %v837 = vxor.u32 %v836, 2147483648
  %v838 = vmul.f32 %v837, 1.442695
  %v839 = vpow.pop %v838
  %v840 = vadd.f32 %v839, 1.0
  %v841 = vrcp.pop %v840
  %v842 = vmul.f32 1.0, %v841
  %v843 = vtanh.pop %v836
  %v844 = vmul.f32 %v842, %v777
  %846 = vrot.lane.b32.xlu0 %v843, 32
  %v847 = vpop.permute.xlu0 %846
  %v849 = vmul.f32 %v842, %v847
  %851 = vrot.lane.b32.xlu0 %v849, 32
  %v852 = vpop.permute.xlu0 %851
  %v854 = vadd.f32 %v844, %v852
  %v855 = vtanh.pop %v854
  %857 = vrot.lane.b32.xlu0 %v855, 32
  %v858 = vpop.permute.xlu0 %857
  %v860 = vmul.f32 %v842, %v858
  %862 = vrot.lane.b32.xlu0 %v860, 64
  %v863 = vpop.permute.xlu0 %862
  %865 = vst.msk [vmem:[#allocation2 + $0x30] sm:$0xff] %vm194, %v863
  %v866 = vpack.c.bf16 %v860, %v860
  %868 = vrot.lane.b32.xlu0 %v866, 64
  %v869 = vpop.permute.xlu0 %868
  %v871 = vsel %vm194, %v869, 0
  %873 = vmatprep.subr.bf16.mxu0 0
  %874 = vmatpush1.bf16.msra.mxu0 %v33
  %875 = vmatprep.subr.bf16.mxu0 0
  %876 = vmatpush1.bf16.msra.mxu0 %v34
  %877 = vmatprep.subr.bf16.mxu0 0
  %878 = vmatpush1.bf16.msra.mxu0 0
  %879 = vmatprep.subr.bf16.mxu0 0
  %880 = vmatpush1.bf16.msra.mxu0 0
  %881 = vmatprep.subr.bf16.mxu0 0
  %882 = vmatpush1.bf16.msra.mxu0 0
  %883 = vmatprep.subr.bf16.mxu0 0
  %884 = vmatpush1.bf16.msra.mxu0 0
  %885 = vmatprep.subr.bf16.mxu0 0
  %886 = vmatpush1.bf16.msra.mxu0 0
  %887 = vmatprep.subr.bf16.mxu0 0
  %888 = vmatpush1.bf16.msra.mxu0 0
  %889 = vmatprep.subr.bf16.mxu0 0
  %890 = vmatpush1.bf16.msra.mxu0 0
  %891 = vmatprep.subr.bf16.mxu0 0
  %892 = vmatpush1.bf16.msra.mxu0 0
  %893 = vmatprep.subr.bf16.mxu0 0
  %894 = vmatpush1.bf16.msra.mxu0 0
  %895 = vmatprep.subr.bf16.mxu0 0
  %896 = vmatpush1.bf16.msra.mxu0 0
  %897 = vmatprep.subr.bf16.mxu0 0
  %898 = vmatpush1.bf16.msra.mxu0 0
  %899 = vmatprep.subr.bf16.mxu0 0
  %900 = vmatpush1.bf16.msra.mxu0 0
  %901 = vmatprep.subr.bf16.mxu0 0
  %902 = vmatpush1.bf16.msra.mxu0 0
  %903 = vmatprep.subr.bf16.mxu0 0
  %904 = vmatpush1.bf16.msra.mxu0 0
  %905 = vmatprep.mubr.bf16.mxu0 0
  %906 = vmatmul.mubr.bf16.gmra.mrb[0].mxu0 %v871
  %v907 = vpop.f32.mrb[0].mxu0
  %v908 = vadd.f32 0.0, %v907
  %v909 = vpop.f32.mrb[0].mxu0
  %v910 = vpop.f32.mrb[0].mxu0
  %v911 = vpop.f32.mrb[0].mxu0
  %912 = vdwg.mxu0
  %v913 = vadd.f32 %v321, %v908
  %v914 = vxor.u32 %v913, 2147483648
  %v915 = vmul.f32 %v914, 1.442695
  %v916 = vpow.pop %v915
  %v917 = vadd.f32 %v916, 1.0
  %v918 = vrcp.pop %v917
  %v919 = vmul.f32 1.0, %v918
  %v920 = vtanh.pop %v913
  %v921 = vmul.f32 %v919, %v854
  %923 = vrot.lane.b32.xlu0 %v920, 32
  %v924 = vpop.permute.xlu0 %923
  %v926 = vmul.f32 %v919, %v924
  %928 = vrot.lane.b32.xlu0 %v926, 32
  %v929 = vpop.permute.xlu0 %928
  %v931 = vadd.f32 %v921, %v929
  %v932 = vtanh.pop %v931
  %934 = vrot.lane.b32.xlu0 %v932, 32
  %v935 = vpop.permute.xlu0 %934
  %v937 = vmul.f32 %v919, %v935
  %939 = vrot.lane.b32.xlu0 %v937, 64
  %v940 = vpop.permute.xlu0 %939
  %942 = vst.msk [vmem:[#allocation2 + $0x38] sm:$0xff] %vm194, %v940
  %v943 = vld [vmem:[#allocation2] sm:$0xff]
  %v944 = vld [vmem:[#allocation2 + $0x8] sm:$0xff]
  %v945 = vld [vmem:[#allocation2 + $0x10] sm:$0xff]
  %v946 = vld [vmem:[#allocation2 + $0x18] sm:$0xff]
  %v947 = vld [vmem:[#allocation2 + $0x20] sm:$0xff]
  %v948 = vld [vmem:[#allocation2 + $0x28] sm:$0xff]
  %v949 = vld [vmem:[#allocation2 + $0x30] sm:$0xff]
  %v950 = vld [vmem:[#allocation2 + $0x38] sm:$0xff]
  %v951 = vlaneseq
  %v952 = vshrl.u32 %v951, 7
  %v953 = vsub.s32 0, %v952
  %v954 = vrot.slane %v39, %v953
  %v956 = vsel %vm194, %v943, 0
  %v959 = vsel %vm194, %v944, 0
  %v962 = vsel %vm194, %v945, 0
  %v965 = vsel %vm194, %v946, 0
  %v968 = vsel %vm194, %v947, 0
  %v971 = vsel %vm194, %v948, 0
  %v974 = vsel %vm194, %v949, 0
  %v977 = vsel %vm194, %v950, 0
  %979 = vmatprep.subr.mxu0 0.0
  %980 = vmatpush1.msra.mxu0 %v35
  %981 = vmatprep.subr.mxu0 0.0
  %982 = vmatpush1.msra.mxu0 %v36
  %983 = vmatprep.subr.mxu0 0.0
  %984 = vmatpush1.msra.mxu0 %v37
  %985 = vmatprep.subr.mxu0 0.0
  %986 = vmatpush1.msra.mxu0 %v38
  %987 = vmatprep.subr.mxu0 0.0
  %988 = vmatpush1.msra.mxu0 0.0
  %989 = vmatprep.subr.mxu0 0.0
  %990 = vmatpush1.msra.mxu0 0.0
  %991 = vmatprep.subr.mxu0 0.0
  %992 = vmatpush1.msra.mxu0 0.0
  %993 = vmatprep.subr.mxu0 0.0
  %994 = vmatpush1.msra.mxu0 0.0
  %995 = vmatprep.subr.mxu0 0.0
  %996 = vmatpush1.msra.mxu0 0.0
  %997 = vmatprep.subr.mxu0 0.0
  %998 = vmatpush1.msra.mxu0 0.0
  %999 = vmatprep.subr.mxu0 0.0
  %1000 = vmatpush1.msra.mxu0 0.0
  %1001 = vmatprep.subr.mxu0 0.0
  %1002 = vmatpush1.msra.mxu0 0.0
  %1003 = vmatprep.subr.mxu0 0.0
  %1004 = vmatpush1.msra.mxu0 0.0
  %1005 = vmatprep.subr.mxu0 0.0
  %1006 = vmatpush1.msra.mxu0 0.0
  %1007 = vmatprep.subr.mxu0 0.0
  %1008 = vmatpush1.msra.mxu0 0.0
  %1009 = vmatprep.subr.mxu0 0.0
  %1010 = vmatpush1.msra.mxu0 0.0
  %1011 = vmatprep.subr.mxu0 0.0
  %1012 = vmatpush1.msra.mxu0 0.0
  %1013 = vmatprep.subr.mxu0 0.0
  %1014 = vmatpush1.msra.mxu0 0.0
  %1015 = vmatprep.subr.mxu0 0.0
  %1016 = vmatpush1.msra.mxu0 0.0
  %1017 = vmatprep.subr.mxu0 0.0
  %1018 = vmatpush1.msra.mxu0 0.0
  %1019 = vmatprep.subr.mxu0 0.0
  %1020 = vmatpush1.msra.mxu0 0.0
  %1021 = vmatprep.subr.mxu0 0.0
  %1022 = vmatpush1.msra.mxu0 0.0
  %1023 = vmatprep.subr.mxu0 0.0
  %1024 = vmatpush1.msra.mxu0 0.0
  %1025 = vmatprep.subr.mxu0 0.0
  %1026 = vmatpush1.msra.mxu0 0.0
  %1027 = vmatprep.subr.mxu0 0.0
  %1028 = vmatpush1.msra.mxu0 0.0
  %1029 = vmatprep.subr.mxu0 0.0
  %1030 = vmatpush1.msra.mxu0 0.0
  %1031 = vmatprep.subr.mxu0 0.0
  %1032 = vmatpush1.msra.mxu0 0.0
  %1033 = vmatprep.subr.mxu0 0.0
  %1034 = vmatpush1.msra.mxu0 0.0
  %1035 = vmatprep.subr.mxu0 0.0
  %1036 = vmatpush1.msra.mxu0 0.0
  %1037 = vmatprep.subr.mxu0 0.0
  %1038 = vmatpush1.msra.mxu0 0.0
  %1039 = vmatprep.subr.mxu0 0.0
  %1040 = vmatpush1.msra.mxu0 0.0
  %1041 = vmatprep.subr.mxu0 0.0
  %1042 = vmatpush1.msra.mxu0 0.0
  %1043 = vmatprep.mubr.f32.mxu0 0.0
  %1044 = vmatmul.mubr.f32.gmra.mrb[0].mxu0 %v956
  %v1045 = vpop.f32.mrb[0].mxu0
  %v1046 = vadd.f32 %v954, %v1045
  %v1047 = vpop.f32.mrb[0].mxu0
  %1048 = vmatprep.mubr.f32.mxu0 0.0
  %1049 = vmatmul.mubr.f32.gmra.mrb[0].mxu0 %v959
  %v1050 = vpop.f32.mrb[0].mxu0
  %v1051 = vadd.f32 %v954, %v1050
  %v1052 = vpop.f32.mrb[0].mxu0
  %1053 = vmatprep.mubr.f32.mxu0 0.0
  %1054 = vmatmul.mubr.f32.gmra.mrb[0].mxu0 %v962
  %v1055 = vpop.f32.mrb[0].mxu0
  %v1056 = vadd.f32 %v954, %v1055
  %v1057 = vpop.f32.mrb[0].mxu0
  %1058 = vmatprep.mubr.f32.mxu0 0.0
  %1059 = vmatmul.mubr.f32.gmra.mrb[0].mxu0 %v965
  %v1060 = vpop.f32.mrb[0].mxu0
  %v1061 = vadd.f32 %v954, %v1060
  %v1062 = vpop.f32.mrb[0].mxu0
  %1063 = vmatprep.mubr.f32.mxu0 0.0
  %1064 = vmatmul.mubr.f32.gmra.mrb[0].mxu0 %v968
  %v1065 = vpop.f32.mrb[0].mxu0
  %v1066 = vadd.f32 %v954, %v1065
  %v1067 = vpop.f32.mrb[0].mxu0
  %1068 = vmatprep.mubr.f32.mxu0 0.0
  %1069 = vmatmul.mubr.f32.gmra.mrb[0].mxu0 %v971
  %v1070 = vpop.f32.mrb[0].mxu0
  %v1071 = vadd.f32 %v954, %v1070
  %v1072 = vpop.f32.mrb[0].mxu0
  %1073 = vmatprep.mubr.f32.mxu0 0.0
  %1074 = vmatmul.mubr.f32.gmra.mrb[0].mxu0 %v974
  %v1075 = vpop.f32.mrb[0].mxu0
  %v1076 = vadd.f32 %v954, %v1075
  %v1077 = vpop.f32.mrb[0].mxu0
  %1078 = vmatprep.mubr.f32.mxu0 0.0
  %1079 = vmatmul.mubr.f32.gmra.mrb[0].mxu0 %v977
  %v1080 = vpop.f32.mrb[0].mxu0
  %v1081 = vadd.f32 %v954, %v1080
  %v1082 = vpop.f32.mrb[0].mxu0
  %1083 = vdwg.mxu0
  %vm1084 = vcmask 48128
  %v1085 = vsel %vm1084, %v1046, -inf
  %1086 = vmax.xlane.f32.xlu0 %v1085
  %v1087 = vpop.xlane.xlu0 %1086
  %v1088 = vsel %vm1084, %v1051, -inf
  %1089 = vmax.xlane.f32.xlu0 %v1088
  %v1090 = vpop.xlane.xlu0 %1089
  %v1091 = vsel %vm1084, %v1056, -inf
  %1092 = vmax.xlane.f32.xlu0 %v1091
  %v1093 = vpop.xlane.xlu0 %1092
  %v1094 = vsel %vm1084, %v1061, -inf
  %1095 = vmax.xlane.f32.xlu0 %v1094
  %v1096 = vpop.xlane.xlu0 %1095
  %v1097 = vsel %vm1084, %v1066, -inf
  %1098 = vmax.xlane.f32.xlu0 %v1097
  %v1099 = vpop.xlane.xlu0 %1098
  %v1100 = vsel %vm1084, %v1071, -inf
  %1101 = vmax.xlane.f32.xlu0 %v1100
  %v1102 = vpop.xlane.xlu0 %1101
  %v1103 = vsel %vm1084, %v1076, -inf
  %1104 = vmax.xlane.f32.xlu0 %v1103
  %v1105 = vpop.xlane.xlu0 %1104
  %v1106 = vsel %vm1084, %v1081, -inf
  %1107 = vmax.xlane.f32.xlu0 %v1106
  %v1108 = vpop.xlane.xlu0 %1107
  %v1109 = vsub.f32 %v1046, %v1087
  %v1110 = vsub.f32 %v1051, %v1090
  %v1111 = vsub.f32 %v1056, %v1093
  %v1112 = vsub.f32 %v1061, %v1096
  %v1113 = vsub.f32 %v1066, %v1099
  %v1114 = vsub.f32 %v1071, %v1102
  %v1115 = vsub.f32 %v1076, %v1105
  %v1116 = vsub.f32 %v1081, %v1108
  %v1117 = vmul.f32 %v1109, 1.442695
  %v1118 = vpow.pop %v1117
  %v1119 = vmul.f32 %v1110, 1.442695
  %v1120 = vpow.pop %v1119
  %v1121 = vmul.f32 %v1111, 1.442695
  %v1122 = vpow.pop %v1121
  %v1123 = vmul.f32 %v1112, 1.442695
  %v1124 = vpow.pop %v1123
  %v1125 = vmul.f32 %v1113, 1.442695
  %v1126 = vpow.pop %v1125
  %v1127 = vmul.f32 %v1114, 1.442695
  %v1128 = vpow.pop %v1127
  %v1129 = vmul.f32 %v1115, 1.442695
  %v1130 = vpow.pop %v1129
  %v1131 = vmul.f32 %v1116, 1.442695
  %v1132 = vpow.pop %v1131
  %v1133 = vsel %vm1084, %v1118, 0.0
  %1134 = vadd.xlane.f32.xlu0 %v1133
  %v1135 = vpop.xlane.xlu0 %1134
  %v1136 = vsel %vm1084, %v1120, 0.0
  %1137 = vadd.xlane.f32.xlu0 %v1136
  %v1138 = vpop.xlane.xlu0 %1137
  %v1139 = vsel %vm1084, %v1122, 0.0
  %1140 = vadd.xlane.f32.xlu0 %v1139
  %v1141 = vpop.xlane.xlu0 %1140
  %v1142 = vsel %vm1084, %v1124, 0.0
  %1143 = vadd.xlane.f32.xlu0 %v1142
  %v1144 = vpop.xlane.xlu0 %1143
  %v1145 = vsel %vm1084, %v1126, 0.0
  %1146 = vadd.xlane.f32.xlu0 %v1145
  %v1147 = vpop.xlane.xlu0 %1146
  %v1148 = vsel %vm1084, %v1128, 0.0
  %1149 = vadd.xlane.f32.xlu0 %v1148
  %v1150 = vpop.xlane.xlu0 %1149
  %v1151 = vsel %vm1084, %v1130, 0.0
  %1152 = vadd.xlane.f32.xlu0 %v1151
  %v1153 = vpop.xlane.xlu0 %1152
  %v1154 = vsel %vm1084, %v1132, 0.0
  %1155 = vadd.xlane.f32.xlu0 %v1154
  %v1156 = vpop.xlane.xlu0 %1155
  %v1157 = vlog2.pop %v1135
  %v1158 = vmul.f32 %v1157, 0.6931472
  %v1159 = vlog2.pop %v1138
  %v1160 = vmul.f32 %v1159, 0.6931472
  %v1161 = vlog2.pop %v1141
  %v1162 = vmul.f32 %v1161, 0.6931472
  %v1163 = vlog2.pop %v1144
  %v1164 = vmul.f32 %v1163, 0.6931472
  %v1165 = vlog2.pop %v1147
  %v1166 = vmul.f32 %v1165, 0.6931472
  %v1167 = vlog2.pop %v1150
  %v1168 = vmul.f32 %v1167, 0.6931472
  %v1169 = vlog2.pop %v1153
  %v1170 = vmul.f32 %v1169, 0.6931472
  %v1171 = vlog2.pop %v1156
  %v1172 = vmul.f32 %v1171, 0.6931472
  %v1173 = vsub.f32 %v1109, %v1158
  %v1174 = vsub.f32 %v1110, %v1160
  %v1175 = vsub.f32 %v1111, %v1162
  %v1176 = vsub.f32 %v1112, %v1164
  %v1177 = vsub.f32 %v1113, %v1166
  %v1178 = vsub.f32 %v1114, %v1168
  %v1179 = vsub.f32 %v1115, %v1170
  %v1180 = vsub.f32 %v1116, %v1172
  %v1181 = vmul.f32 %v1173, 1.442695
  %v1182 = vpow.pop %v1181
  %v1183 = vmul.f32 %v1174, 1.442695
  %v1184 = vpow.pop %v1183
  %v1185 = vmul.f32 %v1175, 1.442695
  %v1186 = vpow.pop %v1185
  %v1187 = vmul.f32 %v1176, 1.442695
  %v1188 = vpow.pop %v1187
  %v1189 = vmul.f32 %v1177, 1.442695
  %v1190 = vpow.pop %v1189
  %v1191 = vmul.f32 %v1178, 1.442695
  %v1192 = vpow.pop %v1191
  %v1193 = vmul.f32 %v1179, 1.442695
  %v1194 = vpow.pop %v1193
  %v1195 = vmul.f32 %v1180, 1.442695
  %v1196 = vpow.pop %v1195
  %v1197 = vmul.f32 %v1182, %v1173
  %v1198 = vmul.f32 %v1184, %v1174
  %v1199 = vmul.f32 %v1186, %v1175
  %v1200 = vmul.f32 %v1188, %v1176
  %v1201 = vmul.f32 %v1190, %v1177
  %v1202 = vmul.f32 %v1192, %v1178
  %v1203 = vmul.f32 %v1194, %v1179
  %v1204 = vmul.f32 %v1196, %v1180
  %v1205 = vsel %vm1084, %v1197, 0.0
  %1206 = vadd.xlane.f32.xlu0 %v1205
  %v1207 = vpop.xlane.xlu0 %1206
  %v1208 = vsel %vm1084, %v1198, 0.0
  %1209 = vadd.xlane.f32.xlu0 %v1208
  %v1210 = vpop.xlane.xlu0 %1209
  %v1211 = vsel %vm1084, %v1199, 0.0
  %1212 = vadd.xlane.f32.xlu0 %v1211
  %v1213 = vpop.xlane.xlu0 %1212
  %v1214 = vsel %vm1084, %v1200, 0.0
  %1215 = vadd.xlane.f32.xlu0 %v1214
  %v1216 = vpop.xlane.xlu0 %1215
  %v1217 = vsel %vm1084, %v1201, 0.0
  %1218 = vadd.xlane.f32.xlu0 %v1217
  %v1219 = vpop.xlane.xlu0 %1218
  %v1220 = vsel %vm1084, %v1202, 0.0
  %1221 = vadd.xlane.f32.xlu0 %v1220
  %v1222 = vpop.xlane.xlu0 %1221
  %v1223 = vsel %vm1084, %v1203, 0.0
  %1224 = vadd.xlane.f32.xlu0 %v1223
  %v1225 = vpop.xlane.xlu0 %1224
  %v1226 = vsel %vm1084, %v1204, 0.0
  %1227 = vadd.xlane.f32.xlu0 %v1226
  %v1228 = vpop.xlane.xlu0 %1227
  %v1229 = vsub.f32 0.0, %v1207
  %v1230 = vsub.f32 0.0, %v1210
  %v1231 = vsub.f32 0.0, %v1213
  %v1232 = vsub.f32 0.0, %v1216
  %v1233 = vsub.f32 0.0, %v1219
  %v1234 = vsub.f32 0.0, %v1222
  %v1235 = vsub.f32 0.0, %v1225
  %v1236 = vsub.f32 0.0, %v1228
  %v1237 = vlaneseq
  %v1238 = vand.u32 %v1237, 127
  %v1239 = vld [vmem:[%s3] sm:$0xff]
  %v1240 = vld [vmem:[%s3 + $0x8] sm:$0xff]
  %v1241 = vld [vmem:[%s3 + $0x10] sm:$0xff]
  %v1242 = vld [vmem:[%s3 + $0x18] sm:$0xff]
  %v1243 = vld [vmem:[%s3 + $0x20] sm:$0xff]
  %v1244 = vld [vmem:[%s3 + $0x28] sm:$0xff]
  %v1245 = vld [vmem:[%s3 + $0x30] sm:$0xff]
  %v1246 = vld [vmem:[%s3 + $0x38] sm:$0xff]
  %1247 = vset.pattern.permute.xlu0 0
  %1248 = vperm.xlu0 %1247, %v1239
  %v1249 = vpop.permute.xlu0 %1248
  %1250 = vset.pattern.permute.xlu0 0
  %1251 = vperm.xlu0 %1250, %v1240
  %v1252 = vpop.permute.xlu0 %1251
  %1253 = vset.pattern.permute.xlu0 0
  %1254 = vperm.xlu0 %1253, %v1241
  %v1255 = vpop.permute.xlu0 %1254
  %1256 = vset.pattern.permute.xlu0 0
  %1257 = vperm.xlu0 %1256, %v1242
  %v1258 = vpop.permute.xlu0 %1257
  %1259 = vset.pattern.permute.xlu0 0
  %1260 = vperm.xlu0 %1259, %v1243
  %v1261 = vpop.permute.xlu0 %1260
  %1262 = vset.pattern.permute.xlu0 0
  %1263 = vperm.xlu0 %1262, %v1244
  %v1264 = vpop.permute.xlu0 %1263
  %1265 = vset.pattern.permute.xlu0 0
  %1266 = vperm.xlu0 %1265, %v1245
  %v1267 = vpop.permute.xlu0 %1266
  %1268 = vset.pattern.permute.xlu0 0
  %1269 = vperm.xlu0 %1268, %v1246
  %v1270 = vpop.permute.xlu0 %1269
  %vm1271 = vcmp.eq.s32.totalorder %v1238, %v1249
  %vm1272 = vcmp.eq.s32.totalorder %v1238, %v1252
  %vm1273 = vcmp.eq.s32.totalorder %v1238, %v1255
  %vm1274 = vcmp.eq.s32.totalorder %v1238, %v1258
  %vm1275 = vcmp.eq.s32.totalorder %v1238, %v1261
  %vm1276 = vcmp.eq.s32.totalorder %v1238, %v1264
  %vm1277 = vcmp.eq.s32.totalorder %v1238, %v1267
  %vm1278 = vcmp.eq.s32.totalorder %v1238, %v1270
  %v1279 = vsel %vm1271, 1, 0
  %v1280 = vsel %vm1272, 1, 0
  %v1281 = vsel %vm1273, 1, 0
  %v1282 = vsel %vm1274, 1, 0
  %v1283 = vsel %vm1275, 1, 0
  %v1284 = vsel %vm1276, 1, 0
  %v1285 = vsel %vm1277, 1, 0
  %v1286 = vsel %vm1278, 1, 0
  %v1287 = vcvt.s32.f32 %v1279
  %v1288 = vcvt.s32.f32 %v1280
  %v1289 = vcvt.s32.f32 %v1281
  %v1290 = vcvt.s32.f32 %v1282
  %v1291 = vcvt.s32.f32 %v1283
  %v1292 = vcvt.s32.f32 %v1284
  %v1293 = vcvt.s32.f32 %v1285
  %v1294 = vcvt.s32.f32 %v1286
  %v1295 = vmul.f32 %v1173, %v1287
  %v1296 = vmul.f32 %v1174, %v1288
  %v1297 = vmul.f32 %v1175, %v1289
  %v1298 = vmul.f32 %v1176, %v1290
  %v1299 = vmul.f32 %v1177, %v1291
  %v1300 = vmul.f32 %v1178, %v1292
  %v1301 = vmul.f32 %v1179, %v1293
  %v1302 = vmul.f32 %v1180, %v1294
  %v1303 = vsel %vm1084, %v1295, 0.0
  %1304 = vadd.xlane.f32.xlu0 %v1303
  %v1305 = vpop.xlane.xlu0 %1304
  %v1306 = vsel %vm1084, %v1296, 0.0
  %1307 = vadd.xlane.f32.xlu0 %v1306
  %v1308 = vpop.xlane.xlu0 %1307
  %v1309 = vsel %vm1084, %v1297, 0.0
  %1310 = vadd.xlane.f32.xlu0 %v1309
  %v1311 = vpop.xlane.xlu0 %1310
  %v1312 = vsel %vm1084, %v1298, 0.0
  %1313 = vadd.xlane.f32.xlu0 %v1312
  %v1314 = vpop.xlane.xlu0 %1313
  %v1315 = vsel %vm1084, %v1299, 0.0
  %1316 = vadd.xlane.f32.xlu0 %v1315
  %v1317 = vpop.xlane.xlu0 %1316
  %v1318 = vsel %vm1084, %v1300, 0.0
  %1319 = vadd.xlane.f32.xlu0 %v1318
  %v1320 = vpop.xlane.xlu0 %1319
  %v1321 = vsel %vm1084, %v1301, 0.0
  %1322 = vadd.xlane.f32.xlu0 %v1321
  %v1323 = vpop.xlane.xlu0 %1322
  %v1324 = vsel %vm1084, %v1302, 0.0
  %1325 = vadd.xlane.f32.xlu0 %v1324
  %v1326 = vpop.xlane.xlu0 %1325
  %1327 = vst.msk [vmem:[%s5] sm:$0xff] %vm1084, %v1173
  %1328 = vst.msk [vmem:[%s5 + $0x8] sm:$0xff] %vm1084, %v1174
  %1329 = vst.msk [vmem:[%s5 + $0x10] sm:$0xff] %vm1084, %v1175
  %1330 = vst.msk [vmem:[%s5 + $0x18] sm:$0xff] %vm1084, %v1176
  %1331 = vst.msk [vmem:[%s5 + $0x20] sm:$0xff] %vm1084, %v1177
  %1332 = vst.msk [vmem:[%s5 + $0x28] sm:$0xff] %vm1084, %v1178
  %1333 = vst.msk [vmem:[%s5 + $0x30] sm:$0xff] %vm1084, %v1179
  %1334 = vst.msk [vmem:[%s5 + $0x38] sm:$0xff] %vm1084, %v1180
  %vm1335 = vcmask 56368
  %1336 = vst.msk [vmem:[%s5] sm:$0xff] %vm1335, %v1305
  %1337 = vst.msk [vmem:[%s5 + $0x8] sm:$0xff] %vm1335, %v1308
  %1338 = vst.msk [vmem:[%s5 + $0x10] sm:$0xff] %vm1335, %v1311
  %1339 = vst.msk [vmem:[%s5 + $0x18] sm:$0xff] %vm1335, %v1314
  %1340 = vst.msk [vmem:[%s5 + $0x20] sm:$0xff] %vm1335, %v1317
  %1341 = vst.msk [vmem:[%s5 + $0x28] sm:$0xff] %vm1335, %v1320
  %1342 = vst.msk [vmem:[%s5 + $0x30] sm:$0xff] %vm1335, %v1323
  %1343 = vst.msk [vmem:[%s5 + $0x38] sm:$0xff] %vm1335, %v1326
  %vm1344 = vcmask 64568
  %1345 = vst.msk [vmem:[%s5] sm:$0xff] %vm1344, %v1229
  %1346 = vst.msk [vmem:[%s5 + $0x8] sm:$0xff] %vm1344, %v1230
  %1347 = vst.msk [vmem:[%s5 + $0x10] sm:$0xff] %vm1344, %v1231
  %1348 = vst.msk [vmem:[%s5 + $0x18] sm:$0xff] %vm1344, %v1232
  %1349 = vst.msk [vmem:[%s5 + $0x20] sm:$0xff] %vm1344, %v1233
  %1350 = vst.msk [vmem:[%s5 + $0x28] sm:$0xff] %vm1344, %v1234
  %1351 = vst.msk [vmem:[%s5 + $0x30] sm:$0xff] %vm1344, %v1235
  %1352 = vst.msk [vmem:[%s5 + $0x38] sm:$0xff] %vm1344, %v1236
  %1361 = vrot.lane.b32.xlu0 %v1046, 2
  %v1362 = vpop.permute.xlu0 %1361
  %1363 = vrot.lane.b32.xlu0 %v1051, 2
  %v1364 = vpop.permute.xlu0 %1363
  %1365 = vrot.lane.b32.xlu0 %v1056, 2
  %v1366 = vpop.permute.xlu0 %1365
  %1367 = vrot.lane.b32.xlu0 %v1061, 2
  %v1368 = vpop.permute.xlu0 %1367
  %1369 = vrot.lane.b32.xlu0 %v1066, 2
  %v1370 = vpop.permute.xlu0 %1369
  %1371 = vrot.lane.b32.xlu0 %v1071, 2
  %v1372 = vpop.permute.xlu0 %1371
  %1373 = vrot.lane.b32.xlu0 %v1076, 2
  %v1374 = vpop.permute.xlu0 %1373
  %1375 = vrot.lane.b32.xlu0 %v1081, 2
  %v1376 = vpop.permute.xlu0 %1375
  %vm1385 = vcmask 72768
  %1386 = vst.msk [vmem:[%s5] sm:$0xff] %vm1385, %v1362
  %1387 = vst.msk [vmem:[%s5 + $0x8] sm:$0xff] %vm1385, %v1364
  %1388 = vst.msk [vmem:[%s5 + $0x10] sm:$0xff] %vm1385, %v1366
  %1389 = vst.msk [vmem:[%s5 + $0x18] sm:$0xff] %vm1385, %v1368
  %1390 = vst.msk [vmem:[%s5 + $0x20] sm:$0xff] %vm1385, %v1370
  %1391 = vst.msk [vmem:[%s5 + $0x28] sm:$0xff] %vm1385, %v1372
  %1392 = vst.msk [vmem:[%s5 + $0x30] sm:$0xff] %vm1385, %v1374
  %1393 = vst.msk [vmem:[%s5 + $0x38] sm:$0xff] %vm1385, %v1376
  // Predicated region
  $region22: #{tpu_custom_call.1} parent=0 // pred_check
    _
  $region23: #{tpu_custom_call.1} parent=0 // pred_check_branch
    %1395 = sbr.rel (0) target = $region25
  $region24: #{tpu_custom_call.1} parent=0 // pred_region
    _
  $region25: #{tpu_custom_call.1} parent=0 // pred_fallthru
    _
  // Predicated region
  $region26: #{tpu_custom_call.1} parent=0 // pred_check
    _
  $region27: #{tpu_custom_call.1} parent=0 // pred_check_branch
    %1397 = sbr.rel (0) target = $region29
  $region28: #{tpu_custom_call.1} parent=0 // pred_region
    _
  $region29: #{tpu_custom_call.1} parent=0 // pred_fallthru
    _

</llo_original>
